<compile_context>
chip_gen: v6e
topology: v6e:2x2x1
jax: 0.10.0
libtpu: 0.0.40
codegen_flags: <defaults>
</compile_context>

<pallas_src>
import jax
import jax.numpy as jnp
from jax import lax
from jax.experimental import pallas as pl
from jax.experimental.pallas import tpu as pltpu


# ----------------------------------------------------------------------------
# Kernel 1: full recurrent decode (attention + LSTM + decode head) -> dec(T,B,F)
# ----------------------------------------------------------------------------
def san_decoder_kernel(prev_ref, feat_ref,
                       w_init_ref, b_init_ref,
                       wq_ref, bq_ref,
                       w2a_c_ref, w2a_w_ref, b2a_ref,
                       wih_c_ref, wih_w_ref, whh_ref, blstm_ref,
                       wh2o_ref, bh2o_ref, wc2o_ref, bc2o_ref,
                       dec_ref):
    T = dec_ref.shape[0]
    Hp = whh_ref.shape[0]          # hidden size padded to a multiple of 128

    def mm(x, w_ref):              # MXU matmul; operand dtype follows the weight
        w = w_ref[...]
        return jnp.dot(x.astype(w.dtype), w, preferred_element_type=jnp.float32)

    # Loop-invariant values (small): biases + one f32 cast of the features.
    feats = feat_ref[...].astype(jnp.float32)                 # (B, L, F)
    b_init = b_init_ref[...]
    bq, b2a = bq_ref[...], b2a_ref[...]
    blstm = blstm_ref[...]
    bh2o, bc2o = bh2o_ref[...], bc2o_ref[...]

    def attend(q):                 # q: (B, F) f32 -> (B, F) context (VPU/XLU path)
        s = jnp.sum(q[:, None, :] * feats, axis=-1)           # (B, L)  lane reduce
        s = s - jnp.max(s, axis=-1, keepdims=True)
        e = jnp.exp(s)
        inv = pl.reciprocal(jnp.sum(e, axis=-1, keepdims=True), approx=False)
        alpha = e * inv                                       # (B, L)
        return jnp.sum(alpha[:, :, None] * feats, axis=1)     # (B, F)  sublane reduce

    # init_lstm: h0 = c0 = tanh(Linear(mean(features over regions)))
    feat_mean = jnp.mean(feats, axis=1)                       # (B, F)
    h0 = jnp.tanh(mm(feat_mean, w_init_ref) + b_init)         # (B, Hp); padded lanes = 0

    def step(t, carry):
        h, c = carry
        word = prev_ref[t].astype(jnp.float32)                # (B, F)

        # first ('general') attention: project hidden into feature space
        context = attend(mm(h, wq_ref) + bq)                  # (B, F)

        # u_vec = second_attn(cat(context, word))  (concat via split weights)
        u_vec = mm(context, w2a_c_ref) + mm(word, w2a_w_ref) + b2a
        ctx2 = attend(u_vec)                                  # (B, F)

        # LSTM on x = cat(ctx2, word): 3 fused-gate matmuls -> (B, 4*Hp),
        # gate blocks are 128-lane aligned (Hp multiple of 128).
        pre = (mm(ctx2, wih_c_ref) + mm(word, wih_w_ref)
               + mm(h, whh_ref) + blstm)
        i_g = jax.nn.sigmoid(pre[:, 0 * Hp:1 * Hp])
        f_g = jax.nn.sigmoid(pre[:, 1 * Hp:2 * Hp])
        g_g = jnp.tanh(pre[:, 2 * Hp:3 * Hp])
        o_g = jax.nn.sigmoid(pre[:, 3 * Hp:4 * Hp])
        c_new = f_g * c + i_g * g_g                           # padded lanes stay 0
        h_new = o_g * jnp.tanh(c_new)

        # decode head (without the vocab projection): tanh(h2out(h)+ctx2out(ctx)+word)
        dec = jnp.tanh(mm(h_new, wh2o_ref) + bh2o
                       + mm(context, wc2o_ref) + bc2o + word)
        dec_ref[t] = dec.astype(dec_ref.dtype)
        return h_new, c_new

    lax.fori_loop(0, T, step, (h0, h0), unroll=False)


# ----------------------------------------------------------------------------
# Kernel 2: lane-dense tiled vocab projection  (T*B, F) @ (F, Vp) + b
# ----------------------------------------------------------------------------
def logits_kernel(x_ref, w_ref, b_ref, o_ref):
    w = w_ref[...]
    o_ref[...] = (jnp.dot(x_ref[...].astype(w.dtype), w,
                          preferred_element_type=jnp.float32) + b_ref[...])


def _project_logits(x, wout, bout):
    """x: (M, F) f32; wout: (F, Vp); bout: (1, Vp) f32 -> (M, Vp) f32."""
    M, Fd = x.shape
    Vp = wout.shape[1]
    Mp = ((M + 7) // 8) * 8
    if Mp != M:
        x = jnp.zeros((Mp, Fd), x.dtype).at[:M].set(x)

    tm = Mp
    for cand in (512, 256, 128, 64, 32, 16, 8):
        if Mp % cand == 0:
            tm = cand
            break
    tn = 256 if Vp % 256 == 0 else 128
    grid = (Mp // tm, Vp // tn)

    out = pl.pallas_call(
        logits_kernel,
        out_shape=jax.ShapeDtypeStruct((Mp, Vp), jnp.float32),
        grid=grid,
        in_specs=[pl.BlockSpec((tm, Fd), lambda i, j: (i, 0)),
                  pl.BlockSpec((Fd, tn), lambda i, j: (0, j)),
                  pl.BlockSpec((1, tn), lambda i, j: (0, j))],
        out_specs=pl.BlockSpec((tm, tn), lambda i, j: (i, j)),
        compiler_params=pltpu.CompilerParams(
            dimension_semantics=("parallel", "parallel")),
    )(x, wout, bout)
    return out[:M]


# ----------------------------------------------------------------------------
# Wrapper: weight re-layout (gate fusion, H/V padding), two pallas_calls.
# ----------------------------------------------------------------------------
def _vmem_limit_bytes(resident_bytes):
    try:
        cap = int(pltpu.get_tpu_info().vmem_capacity_bytes)
    except Exception:
        cap = 64 * 1024 * 1024
    want = 2 * resident_bytes + (8 << 20)
    return int(min(max(want, 32 << 20), cap - (8 << 20)))


def san_decoder_forward(params, features, captions, lengths, *,
                        param_dtype=jnp.float32):
    B, Fd, L = features.shape
    H = params['lstm_w_hh'].shape[1]          # lstm_w_hh: (4H, H)
    V = params['out_w'].shape[0]
    T = int(max(lengths))
    Hp = ((H + 127) // 128) * 128             # 128-lane aligned hidden (per gate)
    v_align = 256 if V > 128 else 128         # 256-aligned N tiles on v6e/v7x MXU
    Vp = ((V + v_align - 1) // v_align) * v_align

    f32 = jnp.float32

    # previous-word embeddings, time-major; step 0 uses zeros (matches PyTorch).
    embed = params['embedding'][captions].astype(param_dtype)          # (B, Tc, F)
    prev = jnp.concatenate(
        [jnp.zeros((B, 1, Fd), param_dtype), embed[:, :T - 1]], axis=1)
    prev_t = jnp.transpose(prev, (1, 0, 2))                            # (T, B, F)

    # features as (B, L, F): scores contract F (lane reduce), weighted sum
    # contracts L (sublane reduce) -- both off the MXU's M=1 path.
    feats_lf = jnp.transpose(features, (0, 2, 1)).astype(param_dtype)  # (B, L, F)

    def tw(name):   # (out, in) -> (in, out) so the kernel does x @ W
        return jnp.transpose(params[name]).astype(param_dtype)

    def rb(name):   # bias -> (1, d), kept f32 (added post f32-accumulation)
        return params[name].reshape(1, -1).astype(f32)

    def pad_rows(w, rows):
        return jnp.zeros((rows, w.shape[1]), w.dtype).at[:w.shape[0]].set(w)

    def pad_cols(w, cols):
        return jnp.zeros((w.shape[0], cols), w.dtype).at[:, :w.shape[1]].set(w)

    def pad_gate_cols(w):  # (in, 4H) PyTorch i,f,g,o blocks -> (in, 4*Hp)
        in_dim = w.shape[0]
        w4 = w.reshape(in_dim, 4, H)
        return (jnp.zeros((in_dim, 4, Hp), w.dtype).at[:, :, :H].set(w4)
                .reshape(in_dim, 4 * Hp))

    # init layer (output padded to Hp; padded lanes give tanh(0)=0 forever).
    w_init = pad_cols(tw('init_w'), Hp)                                # (F, Hp)
    b_init = pad_cols(rb('init_b'), Hp)                                # (1, Hp)

    # first attention projection H -> F (input rows padded to Hp).
    wq, bq = pad_rows(tw('attn_w'), Hp), rb('attn_b')                  # (Hp, F)

    # second attention: input = cat(context, word), split weights.
    w2a = tw('second_attn_w')                                          # (2F, F)
    w2a_c, w2a_w, b2a = w2a[:Fd], w2a[Fd:], rb('second_attn_b')

    # fused-gate LSTM weights: (in, 4*Hp), gate g occupies lanes [g*Hp, g*Hp+H).
    wih = tw('lstm_w_ih')                                              # (2F, 4H)
    wih_c = pad_gate_cols(wih[:Fd])                                    # (F, 4Hp)
    wih_w = pad_gate_cols(wih[Fd:])                                    # (F, 4Hp)
    whh = pad_rows(pad_gate_cols(tw('lstm_w_hh')), Hp)                 # (Hp, 4Hp)
    b_lstm4 = (params['lstm_b_ih'] + params['lstm_b_hh']).astype(f32).reshape(4, H)
    b_lstm = (jnp.zeros((4, Hp), f32).at[:, :H].set(b_lstm4)
              .reshape(1, 4 * Hp))

    wh2o, bh2o = pad_rows(tw('h2out_w'), Hp), rb('h2out_b')            # (Hp, F)
    wc2o, bc2o = tw('ctx2out_w'), rb('ctx2out_b')                      # (F, F)

    # vocab projection (kernel 2 only), zero-padded to Vp lanes.
    wout = pad_cols(tw('out_w'), Vp)                                   # (F, Vp)
    bout = pad_cols(rb('out_b'), Vp)                                   # (1, Vp)

    weight_args = [w_init, b_init, wq, bq, w2a_c, w2a_w, b2a,
                   wih_c, wih_w, whh, b_lstm,
                   wh2o, bh2o, wc2o, bc2o]

    resident = sum(int(a.size) * a.dtype.itemsize
                   for a in [prev_t, feats_lf] + weight_args)
    resident += T * B * Fd * 4                                         # dec output

    vmem_spec = pl.BlockSpec(memory_space=pltpu.MemorySpace.VMEM)
    dec = pl.pallas_call(
        san_decoder_kernel,
        out_shape=jax.ShapeDtypeStruct((T, B, Fd), jnp.float32),
        in_specs=[vmem_spec] * (2 + len(weight_args)),
        out_specs=vmem_spec,
        compiler_params=pltpu.CompilerParams(
            vmem_limit_bytes=_vmem_limit_bytes(resident)),
    )(prev_t, feats_lf, *weight_args)

    logits = _project_logits(dec.reshape(T * B, Fd), wout, bout)       # (T*B, Vp)
    logits = logits.reshape(T, B, Vp)[:, :, :V]
    return jnp.transpose(logits, (1, 0, 2))                            # (B, T, V)


# ----------------------------------------------------------------------------
# Pure-JAX reference (mirrors the PyTorch forward with the same Attn choice)
# ----------------------------------------------------------------------------
def san_decoder_reference(params, features, captions, lengths):
    B, F, L = features.shape
    T = int(max(lengths))
    embed = params['embedding'][captions].astype(jnp.float32)

    def linear(x, w, b):
        return x @ w.T + b

    def attend(q, feats):
        scores = jnp.einsum('bf,bfl->bl', q, feats)
        alpha = jax.nn.softmax(scores, axis=-1)
        return jnp.einsum('bl,bfl->bf', alpha, feats)

    feat_mean = jnp.mean(features, axis=2)
    h = jnp.tanh(linear(feat_mean, params['init_w'], params['init_b']))
    c = h
    outs = []
    for i in range(T):
        input_word = jnp.zeros((B, F), jnp.float32) if i == 0 else embed[:, i - 1]
        context = attend(linear(h, params['attn_w'], params['attn_b']), features)
        lstm_in = jnp.concatenate([context, input_word], axis=-1)
        u = linear(lstm_in, params['second_attn_w'], params['second_attn_b'])
        ctx2 = attend(u, features)
        x = jnp.concatenate([ctx2, input_word], axis=-1)
        gates = (linear(x, params['lstm_w_ih'], params['lstm_b_ih'])
                 + linear(h, params['lstm_w_hh'], params['lstm_b_hh']))
        i_g, f_g, g_g, o_g = jnp.split(gates, 4, axis=-1)
        c = jax.nn.sigmoid(f_g) * c + jax.nn.sigmoid(i_g) * jnp.tanh(g_g)
        h = jax.nn.sigmoid(o_g) * jnp.tanh(c)
        out = (linear(h, params['h2out_w'], params['h2out_b'])
               + linear(context, params['ctx2out_w'], params['ctx2out_b'])
               + input_word)
        out = jnp.tanh(out)
        outs.append(linear(out, params['out_w'], params['out_b'])[:, None, :])
    return jnp.concatenate(outs, axis=1)


# ----------------------------------------------------------------------------
# Deterministic parameter init (PyTorch (out_features, in_features) convention)
# ----------------------------------------------------------------------------
def init_params(key, F, H, V):
    ks = jax.random.split(key, 18)
    w = lambda k, shape: (0.1 * jax.random.normal(k, shape)).astype(jnp.float32)
    return {
        'embedding':     w(ks[0], (V, F)),
        'init_w':        w(ks[1], (H, F)),    'init_b':        w(ks[2], (H,)),
        'attn_w':        w(ks[3], (F, H)),    'attn_b':        w(ks[4], (F,)),
        'second_attn_w': w(ks[5], (F, H)),    'second_attn_b': w(ks[6], (F,)),
        'lstm_w_ih':     w(ks[7], (4 * H, H)), 'lstm_b_ih':    w(ks[8], (4 * H,)),
        'lstm_w_hh':     w(ks[9], (4 * H, H)), 'lstm_b_hh':    w(ks[10], (4 * H,)),
        'h2out_w':       w(ks[11], (F, H)),   'h2out_b':       w(ks[12], (F,)),
        'ctx2out_w':     w(ks[13], (F, F)),   'ctx2out_b':     w(ks[14], (F,)),
        'out_w':         w(ks[15], (V, F)),   'out_b':         w(ks[16], (V,)),
    }


if __name__ == "__main__":
    key = jax.random.PRNGKey(0)
    B, F, L, V, T_cap = 2, 32, 16, 32, 8
    H = 2 * F  # required by the module's shape constraints (second_attn / lstm)

    k_p, k_f, k_c = jax.random.split(key, 3)
    params = init_params(k_p, F, H, V)
    features = jax.random.normal(k_f, (B, F, L), jnp.float32)
    captions = jax.random.randint(k_c, (B, T_cap), 0, V)
    lengths = [8, 6]

    out = san_decoder_forward(params, features, captions, lengths)
    out = jax.block_until_ready(out)

    assert out.shape == (B, max(lengths), V), out.shape
    assert bool(jnp.all(jnp.isfinite(out)))

    ref = san_decoder_reference(params, features, captions, lengths)
    if not jnp.allclose(out, ref, rtol=1e-2, atol=1e-2):
        raise AssertionError(
            f"mismatch vs reference: max abs err {jnp.max(jnp.abs(out - ref))}")

    # Exercise the bf16 weight/feature-storage path (production config):
    # accumulation stays f32, so we only sanity-check shape/finiteness here.
    out_bf16 = san_decoder_forward(params, features, captions, lengths,
                                   param_dtype=jnp.bfloat16)
    out_bf16 = jax.block_until_ready(out_bf16)
    assert out_bf16.shape == (B, max(lengths), V)
    assert bool(jnp.all(jnp.isfinite(out_bf16)))

    print("KERNEL_OK")
</pallas_src>

<mosaic_0001>
module attributes {stable_mosaic.version = 11 : i64} {
  func.func @san_decoder_kernel(%arg0: memref<8x2x32xf32, #tpu.memory_space<vmem>>, %arg1: memref<2x16x32xf32, #tpu.memory_space<vmem>>, %arg2: memref<32x128xf32, #tpu.memory_space<vmem>>, %arg3: memref<1x128xf32, #tpu.memory_space<vmem>>, %arg4: memref<128x32xf32, #tpu.memory_space<vmem>>, %arg5: memref<1x32xf32, #tpu.memory_space<vmem>>, %arg6: memref<32x32xf32, #tpu.memory_space<vmem>>, %arg7: memref<32x32xf32, #tpu.memory_space<vmem>>, %arg8: memref<1x32xf32, #tpu.memory_space<vmem>>, %arg9: memref<32x512xf32, #tpu.memory_space<vmem>>, %arg10: memref<32x512xf32, #tpu.memory_space<vmem>>, %arg11: memref<128x512xf32, #tpu.memory_space<vmem>>, %arg12: memref<1x512xf32, #tpu.memory_space<vmem>>, %arg13: memref<128x32xf32, #tpu.memory_space<vmem>>, %arg14: memref<1x32xf32, #tpu.memory_space<vmem>>, %arg15: memref<32x32xf32, #tpu.memory_space<vmem>>, %arg16: memref<1x32xf32, #tpu.memory_space<vmem>>, %arg17: memref<8x2x32xf32, #tpu.memory_space<vmem>>) attributes {dimension_semantics = [], scalar_prefetch = 0 : i64, scratch_operands = 0 : i64, tpu.core_type = #tpu.core_type<tc>} {
    %c0 = arith.constant 0 : index
    %c0_0 = arith.constant 0 : index
    %c0_1 = arith.constant 0 : index
    %0 = vector.load %arg1[%c0, %c0_0, %c0_1] : memref<2x16x32xf32, #tpu.memory_space<vmem>>, vector<2x16x32xf32>
    %c0_2 = arith.constant 0 : index
    %c0_3 = arith.constant 0 : index
    %1 = vector.load %arg3[%c0_2, %c0_3] : memref<1x128xf32, #tpu.memory_space<vmem>>, vector<1x128xf32>
    %c0_4 = arith.constant 0 : index
    %c0_5 = arith.constant 0 : index
    %2 = vector.load %arg5[%c0_4, %c0_5] : memref<1x32xf32, #tpu.memory_space<vmem>>, vector<1x32xf32>
    %c0_6 = arith.constant 0 : index
    %c0_7 = arith.constant 0 : index
    %3 = vector.load %arg8[%c0_6, %c0_7] : memref<1x32xf32, #tpu.memory_space<vmem>>, vector<1x32xf32>
    %c0_8 = arith.constant 0 : index
    %c0_9 = arith.constant 0 : index
    %4 = vector.load %arg12[%c0_8, %c0_9] : memref<1x512xf32, #tpu.memory_space<vmem>>, vector<1x512xf32>
    %c0_10 = arith.constant 0 : index
    %c0_11 = arith.constant 0 : index
    %5 = vector.load %arg14[%c0_10, %c0_11] : memref<1x32xf32, #tpu.memory_space<vmem>>, vector<1x32xf32>
    %c0_12 = arith.constant 0 : index
    %c0_13 = arith.constant 0 : index
    %6 = vector.load %arg16[%c0_12, %c0_13] : memref<1x32xf32, #tpu.memory_space<vmem>>, vector<1x32xf32>
    %cst = arith.constant dense<0.000000e+00> : vector<2x32xf32>
    %7 = vector.multi_reduction <add>, %0, %cst [1] : vector<2x16x32xf32> to vector<2x32xf32>
    %cst_14 = arith.constant 1.600000e+01 : f32
    %8 = vector.broadcast %cst_14 : f32 to vector<2x32xf32>
    %9 = arith.divf %7, %8 : vector<2x32xf32>
    %c0_15 = arith.constant 0 : index
    %c0_16 = arith.constant 0 : index
    %10 = vector.load %arg2[%c0_15, %c0_16] : memref<32x128xf32, #tpu.memory_space<vmem>>, vector<32x128xf32>
    %cst_17 = arith.constant dense<0.000000e+00> : vector<2x128xf32>
    %11 = tpu.matmul %9, %10, %cst_17 {dimension_numbers = #tpu.dot_dimension_numbers<[1], [0], [0], [1], [0, 0, 1, 1], [], []>} : vector<2x32xf32>, vector<32x128xf32>, vector<2x128xf32> -> vector<2x128xf32>
    %12 = vector.broadcast %1 : vector<1x128xf32> to vector<2x128xf32>
    %13 = arith.addf %11, %12 : vector<2x128xf32>
    %14 = math.tanh %13 : vector<2x128xf32>
    %c0_i32 = arith.constant 0 : i32
    %c8_i32 = arith.constant 8 : i32
    %15 = arith.addi %c0_i32, %c8_i32 : i32
    %c1_i32 = arith.constant 1 : i32
    %16:2 = scf.for %arg18 = %c0_i32 to %15 step %c1_i32 iter_args(%arg19 = %14, %arg20 = %14) -> (vector<2x128xf32>, vector<2x128xf32>)  : i32 {
      %17 = arith.index_cast %arg18 : i32 to index
      %c0_19 = arith.constant 0 : index
      %c0_20 = arith.constant 0 : index
      %18 = vector.load %arg0[%17, %c0_19, %c0_20] : memref<8x2x32xf32, #tpu.memory_space<vmem>>, vector<1x2x32xf32>
      %19 = vector.shape_cast %18 : vector<1x2x32xf32> to vector<2x32xf32>
      %c0_21 = arith.constant 0 : index
      %c0_22 = arith.constant 0 : index
      %20 = vector.load %arg4[%c0_21, %c0_22] : memref<128x32xf32, #tpu.memory_space<vmem>>, vector<128x32xf32>
      %cst_23 = arith.constant dense<0.000000e+00> : vector<2x32xf32>
      %21 = tpu.matmul %arg19, %20, %cst_23 {dimension_numbers = #tpu.dot_dimension_numbers<[1], [0], [0], [1], [0, 0, 1, 1], [], []>} : vector<2x128xf32>, vector<128x32xf32>, vector<2x32xf32> -> vector<2x32xf32>
      %22 = vector.broadcast %2 : vector<1x32xf32> to vector<2x32xf32>
      %23 = arith.addf %21, %22 : vector<2x32xf32>
      %24 = vector.shape_cast %23 : vector<2x32xf32> to vector<2x1x32xf32>
      %25 = vector.broadcast %24 : vector<2x1x32xf32> to vector<2x16x32xf32>
      %26 = arith.mulf %25, %0 : vector<2x16x32xf32>
      %cst_24 = arith.constant dense<0.000000e+00> : vector<2x16xf32>
      %27 = vector.multi_reduction <add>, %26, %cst_24 [2] : vector<2x16x32xf32> to vector<2x16xf32>
      %cst_25 = arith.constant dense<0xFF800000> : vector<2xf32>
      %28 = vector.multi_reduction <maximumf>, %27, %cst_25 [1] : vector<2x16xf32> to vector<2xf32>
      %29 = vector.shape_cast %28 : vector<2xf32> to vector<2x1xf32>
      %30 = vector.broadcast %29 : vector<2x1xf32> to vector<2x16xf32>
      %31 = arith.subf %27, %30 : vector<2x16xf32>
      %32 = math.exp %31 : vector<2x16xf32>
      %cst_26 = arith.constant dense<0.000000e+00> : vector<2xf32>
      %33 = vector.multi_reduction <add>, %32, %cst_26 [1] : vector<2x16xf32> to vector<2xf32>
      %34 = vector.shape_cast %33 : vector<2xf32> to vector<2x1xf32>
      %35 = tpu.reciprocal %34 : vector<2x1xf32> -> vector<2x1xf32>
      %36 = vector.broadcast %35 : vector<2x1xf32> to vector<2x16xf32>
      %37 = arith.mulf %32, %36 : vector<2x16xf32>
      %38 = vector.shape_cast %37 : vector<2x16xf32> to vector<2x16x1xf32>
      %39 = vector.broadcast %38 : vector<2x16x1xf32> to vector<2x16x32xf32>
      %40 = arith.mulf %39, %0 : vector<2x16x32xf32>
      %cst_27 = arith.constant dense<0.000000e+00> : vector<2x32xf32>
      %41 = vector.multi_reduction <add>, %40, %cst_27 [1] : vector<2x16x32xf32> to vector<2x32xf32>
      %c0_28 = arith.constant 0 : index
      %c0_29 = arith.constant 0 : index
      %42 = vector.load %arg6[%c0_28, %c0_29] : memref<32x32xf32, #tpu.memory_space<vmem>>, vector<32x32xf32>
      %cst_30 = arith.constant dense<0.000000e+00> : vector<2x32xf32>
      %43 = tpu.matmul %41, %42, %cst_30 {dimension_numbers = #tpu.dot_dimension_numbers<[1], [0], [0], [1], [0, 0, 1, 1], [], []>} : vector<2x32xf32>, vector<32x32xf32>, vector<2x32xf32> -> vector<2x32xf32>
      %c0_31 = arith.constant 0 : index
      %c0_32 = arith.constant 0 : index
      %44 = vector.load %arg7[%c0_31, %c0_32] : memref<32x32xf32, #tpu.memory_space<vmem>>, vector<32x32xf32>
      %cst_33 = arith.constant dense<0.000000e+00> : vector<2x32xf32>
      %45 = tpu.matmul %19, %44, %cst_33 {dimension_numbers = #tpu.dot_dimension_numbers<[1], [0], [0], [1], [0, 0, 1, 1], [], []>} : vector<2x32xf32>, vector<32x32xf32>, vector<2x32xf32> -> vector<2x32xf32>
      %46 = arith.addf %43, %45 : vector<2x32xf32>
      %47 = vector.broadcast %3 : vector<1x32xf32> to vector<2x32xf32>
      %48 = arith.addf %46, %47 : vector<2x32xf32>
      %49 = vector.shape_cast %48 : vector<2x32xf32> to vector<2x1x32xf32>
      %50 = vector.broadcast %49 : vector<2x1x32xf32> to vector<2x16x32xf32>
      %51 = arith.mulf %50, %0 : vector<2x16x32xf32>
      %cst_34 = arith.constant dense<0.000000e+00> : vector<2x16xf32>
      %52 = vector.multi_reduction <add>, %51, %cst_34 [2] : vector<2x16x32xf32> to vector<2x16xf32>
      %cst_35 = arith.constant dense<0xFF800000> : vector<2xf32>
      %53 = vector.multi_reduction <maximumf>, %52, %cst_35 [1] : vector<2x16xf32> to vector<2xf32>
      %54 = vector.shape_cast %53 : vector<2xf32> to vector<2x1xf32>
      %55 = vector.broadcast %54 : vector<2x1xf32> to vector<2x16xf32>
      %56 = arith.subf %52, %55 : vector<2x16xf32>
      %57 = math.exp %56 : vector<2x16xf32>
      %cst_36 = arith.constant dense<0.000000e+00> : vector<2xf32>
      %58 = vector.multi_reduction <add>, %57, %cst_36 [1] : vector<2x16xf32> to vector<2xf32>
      %59 = vector.shape_cast %58 : vector<2xf32> to vector<2x1xf32>
      %60 = tpu.reciprocal %59 : vector<2x1xf32> -> vector<2x1xf32>
      %61 = vector.broadcast %60 : vector<2x1xf32> to vector<2x16xf32>
      %62 = arith.mulf %57, %61 : vector<2x16xf32>
      %63 = vector.shape_cast %62 : vector<2x16xf32> to vector<2x16x1xf32>
      %64 = vector.broadcast %63 : vector<2x16x1xf32> to vector<2x16x32xf32>
      %65 = arith.mulf %64, %0 : vector<2x16x32xf32>
      %cst_37 = arith.constant dense<0.000000e+00> : vector<2x32xf32>
      %66 = vector.multi_reduction <add>, %65, %cst_37 [1] : vector<2x16x32xf32> to vector<2x32xf32>
      %c0_38 = arith.constant 0 : index
      %c0_39 = arith.constant 0 : index
      %67 = vector.load %arg9[%c0_38, %c0_39] : memref<32x512xf32, #tpu.memory_space<vmem>>, vector<32x512xf32>
      %cst_40 = arith.constant dense<0.000000e+00> : vector<2x512xf32>
      %68 = tpu.matmul %66, %67, %cst_40 {dimension_numbers = #tpu.dot_dimension_numbers<[1], [0], [0], [1], [0, 0, 1, 1], [], []>} : vector<2x32xf32>, vector<32x512xf32>, vector<2x512xf32> -> vector<2x512xf32>
      %c0_41 = arith.constant 0 : index
      %c0_42 = arith.constant 0 : index
      %69 = vector.load %arg10[%c0_41, %c0_42] : memref<32x512xf32, #tpu.memory_space<vmem>>, vector<32x512xf32>
      %cst_43 = arith.constant dense<0.000000e+00> : vector<2x512xf32>
      %70 = tpu.matmul %19, %69, %cst_43 {dimension_numbers = #tpu.dot_dimension_numbers<[1], [0], [0], [1], [0, 0, 1, 1], [], []>} : vector<2x32xf32>, vector<32x512xf32>, vector<2x512xf32> -> vector<2x512xf32>
      %71 = arith.addf %68, %70 : vector<2x512xf32>
      %c0_44 = arith.constant 0 : index
      %c0_45 = arith.constant 0 : index
      %72 = vector.load %arg11[%c0_44, %c0_45] : memref<128x512xf32, #tpu.memory_space<vmem>>, vector<128x512xf32>
      %cst_46 = arith.constant dense<0.000000e+00> : vector<2x512xf32>
      %73 = tpu.matmul %arg19, %72, %cst_46 {dimension_numbers = #tpu.dot_dimension_numbers<[1], [0], [0], [1], [0, 0, 1, 1], [], []>} : vector<2x128xf32>, vector<128x512xf32>, vector<2x512xf32> -> vector<2x512xf32>
      %74 = arith.addf %71, %73 : vector<2x512xf32>
      %75 = vector.broadcast %4 : vector<1x512xf32> to vector<2x512xf32>
      %76 = arith.addf %74, %75 : vector<2x512xf32>
      %77 = vector.extract_strided_slice %76 {offsets = [0, 0], sizes = [2, 128], strides = [1, 1]} : vector<2x512xf32> to vector<2x128xf32>
      %78 = arith.negf %77 : vector<2x128xf32>
      %79 = math.exp %78 : vector<2x128xf32>
      %cst_47 = arith.constant 1.000000e+00 : f32
      %80 = vector.broadcast %cst_47 : f32 to vector<2x128xf32>
      %81 = arith.addf %80, %79 : vector<2x128xf32>
      %82 = arith.divf %80, %81 : vector<2x128xf32>
      %83 = vector.extract_strided_slice %76 {offsets = [0, 128], sizes = [2, 128], strides = [1, 1]} : vector<2x512xf32> to vector<2x128xf32>
      %84 = arith.negf %83 : vector<2x128xf32>
      %85 = math.exp %84 : vector<2x128xf32>
      %cst_48 = arith.constant 1.000000e+00 : f32
      %86 = vector.broadcast %cst_48 : f32 to vector<2x128xf32>
      %87 = arith.addf %86, %85 : vector<2x128xf32>
      %88 = arith.divf %86, %87 : vector<2x128xf32>
      %89 = vector.extract_strided_slice %76 {offsets = [0, 256], sizes = [2, 128], strides = [1, 1]} : vector<2x512xf32> to vector<2x128xf32>
      %90 = math.tanh %89 : vector<2x128xf32>
      %91 = vector.extract_strided_slice %76 {offsets = [0, 384], sizes = [2, 128], strides = [1, 1]} : vector<2x512xf32> to vector<2x128xf32>
      %92 = arith.negf %91 : vector<2x128xf32>
      %93 = math.exp %92 : vector<2x128xf32>
      %cst_49 = arith.constant 1.000000e+00 : f32
      %94 = vector.broadcast %cst_49 : f32 to vector<2x128xf32>
      %95 = arith.addf %94, %93 : vector<2x128xf32>
      %96 = arith.divf %94, %95 : vector<2x128xf32>
      %97 = arith.mulf %88, %arg20 : vector<2x128xf32>
      %98 = arith.mulf %82, %90 : vector<2x128xf32>
      %99 = arith.addf %97, %98 : vector<2x128xf32>
      %100 = math.tanh %99 : vector<2x128xf32>
      %101 = arith.mulf %96, %100 : vector<2x128xf32>
      %c0_50 = arith.constant 0 : index
      %c0_51 = arith.constant 0 : index
      %102 = vector.load %arg13[%c0_50, %c0_51] : memref<128x32xf32, #tpu.memory_space<vmem>>, vector<128x32xf32>
      %cst_52 = arith.constant dense<0.000000e+00> : vector<2x32xf32>
      %103 = tpu.matmul %101, %102, %cst_52 {dimension_numbers = #tpu.dot_dimension_numbers<[1], [0], [0], [1], [0, 0, 1, 1], [], []>} : vector<2x128xf32>, vector<128x32xf32>, vector<2x32xf32> -> vector<2x32xf32>
      %104 = vector.broadcast %5 : vector<1x32xf32> to vector<2x32xf32>
      %105 = arith.addf %103, %104 : vector<2x32xf32>
      %c0_53 = arith.constant 0 : index
      %c0_54 = arith.constant 0 : index
      %106 = vector.load %arg15[%c0_53, %c0_54] : memref<32x32xf32, #tpu.memory_space<vmem>>, vector<32x32xf32>
      %cst_55 = arith.constant dense<0.000000e+00> : vector<2x32xf32>
      %107 = tpu.matmul %41, %106, %cst_55 {dimension_numbers = #tpu.dot_dimension_numbers<[1], [0], [0], [1], [0, 0, 1, 1], [], []>} : vector<2x32xf32>, vector<32x32xf32>, vector<2x32xf32> -> vector<2x32xf32>
      %108 = arith.addf %105, %107 : vector<2x32xf32>
      %109 = vector.broadcast %6 : vector<1x32xf32> to vector<2x32xf32>
      %110 = arith.addf %108, %109 : vector<2x32xf32>
      %111 = arith.addf %110, %19 : vector<2x32xf32>
      %112 = math.tanh %111 : vector<2x32xf32>
      %113 = arith.index_cast %arg18 : i32 to index
      %c0_56 = arith.constant 0 : index
      %c0_57 = arith.constant 0 : index
      %114 = vector.load %arg17[%113, %c0_56, %c0_57] : memref<8x2x32xf32, #tpu.memory_space<vmem>>, vector<1x2x32xf32>
      %115 = vector.shape_cast %114 : vector<1x2x32xf32> to vector<2x32xf32>
      %116 = vector.shape_cast %112 : vector<2x32xf32> to vector<1x2x32xf32>
      tpu.vector_store %arg17[%113, %c0_56, %c0_57], %116 {strides = array<i32>} : memref<8x2x32xf32, #tpu.memory_space<vmem>>, vector<1x2x32xf32>,
      scf.yield %101, %99 : vector<2x128xf32>, vector<2x128xf32>
    }
    %c8_i32_18 = arith.constant 8 : i32
    return
  }
}

</mosaic_0001>

<llo_original>
// kernel: tpu_custom_call.1
$region0: #{tpu_custom_call.1}
  #allocation0 [shape = 'u32[]', space=smem, size = 0x4, offset = 0x4, fixed_abs, tag = 'smem constant byte address 0x4 - core index']
  #allocation1 [shape = 'u32[144,128]{1,0:T(1,128)}', space=vmem, size = 0x12000, scoped, tag = 'internal scratch']
  %s0 = inlined_call_operand.hbm [shape: f32[8,2,32], index: 0, kind: input, shape index: {}]
  %s1 = inlined_call_operand.vmem [shape: f32[2,16,32], index: 1, kind: input, shape index: {}]
  %s2 = inlined_call_operand.hbm [shape: f32[32,128], index: 2, kind: input, shape index: {}]
  %s3 = inlined_call_operand.vmem [shape: f32[1,128], index: 3, kind: input, shape index: {}]
  %s4 = inlined_call_operand.vmem [shape: f32[128,32], index: 4, kind: input, shape index: {}]
  %s5 = inlined_call_operand.vmem [shape: f32[1,32], index: 5, kind: input, shape index: {}]
  %s6 = inlined_call_operand.hbm [shape: f32[32,32], index: 6, kind: input, shape index: {}]
  %s7 = inlined_call_operand.hbm [shape: f32[32,32], index: 7, kind: input, shape index: {}]
  %s8 = inlined_call_operand.vmem [shape: f32[1,32], index: 8, kind: input, shape index: {}]
  %s9 = inlined_call_operand.vmem [shape: f32[32,512], index: 9, kind: input, shape index: {}]
  %s10 = inlined_call_operand.vmem [shape: f32[32,512], index: 10, kind: input, shape index: {}]
  %s11 = inlined_call_operand.hbm [shape: f32[128,512], index: 11, kind: input, shape index: {}]
  %s12 = inlined_call_operand.vmem [shape: f32[1,512], index: 12, kind: input, shape index: {}]
  %s13 = inlined_call_operand.vmem [shape: f32[128,32], index: 13, kind: input, shape index: {}]
  %s14 = inlined_call_operand.vmem [shape: f32[1,32], index: 14, kind: input, shape index: {}]
  %s15 = inlined_call_operand.hbm [shape: f32[32,32], index: 15, kind: input, shape index: {}]
  %s16 = inlined_call_operand.vmem [shape: f32[1,32], index: 16, kind: input, shape index: {}]
  %s17 = inlined_call_operand.hbm [shape: f32[8,2,32], index: 17, kind: output, shape index: {}]
  %s18 = sld [smem:[#allocation0]]
  $region109: #{tpu_custom_call.1} parent=0
    _
  %s20 = ssub.s32 1, %s18
  %s21 = scalar_select 0, %s20, %s18
  $region1: #{tpu_custom_call.1} parent=0
    #allocation2 [shape = 'u8[8192]{0}', space=vmem, size = 0x2000, scoped, tag = 'input window, operand 0, single buffered']
    #allocation3 [shape = 's32[1]{0}', space=sflag, size = 0x4, scoped, tag = 'scoped memory for tpu_custom_call.1']
    #allocation4 [shape = 's32[1]{0}', space=sflag, size = 0x4, scoped, tag = 'scoped memory for tpu_custom_call.1']
    #allocation5 [shape = 'u8[16384]{0}', space=vmem, size = 0x4000, scoped, tag = 'input window, operand 2, single buffered']
    #allocation6 [shape = 's32[1]{0}', space=sflag, size = 0x4, scoped, tag = 'scoped memory for tpu_custom_call.1']
    #allocation7 [shape = 'u8[16384]{0}', space=vmem, size = 0x4000, scoped, tag = 'input window, operand 6, single buffered']
    #allocation8 [shape = 'u8[16384]{0}', space=vmem, size = 0x4000, scoped, tag = 'input window, operand 7, single buffered']
    #allocation9 [shape = 's32[1]{0}', space=sflag, size = 0x4, scoped, tag = 'scoped memory for tpu_custom_call.1']
    #allocation10 [shape = 'u8[262144]{0}', space=vmem, size = 0x40000, scoped, tag = 'input window, operand 11, single buffered']
    #allocation11 [shape = 'u8[16384]{0}', space=vmem, size = 0x4000, scoped, tag = 'input window, operand 15, single buffered']
    #allocation12 [shape = 's32[1]{0}', space=sflag, size = 0x4, scoped, tag = 'scoped memory for tpu_custom_call.1']
    #allocation13 [shape = 'u8[8192]{0}', space=vmem, size = 0x2000, scoped, tag = 'output window, operand 0, single buffered']
    %22 = vsyncpa [#allocation3], 0
    %23 = vsyncpa [#allocation6], 0
    %24 = vsyncpa [#allocation9], 0
    %25 = vsyncpa [#allocation12], 0
    %26 = vsyncpa [#allocation4], 0
    // Predicated region
    $region2: #{tpu_custom_call.1} parent=1 // pred_check
      _
    $region3: #{tpu_custom_call.1} parent=1 // pred_check_branch
      %28 = sbr.rel (0) target = $region5
    $region4: #{tpu_custom_call.1} parent=1 // pred_region
      %s30 = ssub.s32 256, 256
      %31 = vsyncadd [#allocation3], %s30
      %s32 = sshll.u32 [#allocation2], 4
      %s33 = int_to_ptr.vmem [resolvable:$true] %s32
      %38 = dma.hbm_to_vmem [thread:$0]  %s0, 256, %s33, [#allocation3], 32, 32, 2
    $region5: #{tpu_custom_call.1} parent=1 // pred_fallthru
      _
    // Predicated region
    $region6: #{tpu_custom_call.1} parent=1 // pred_check
      _
    $region7: #{tpu_custom_call.1} parent=1 // pred_check_branch
      %40 = sbr.rel (0) target = $region9
    $region8: #{tpu_custom_call.1} parent=1 // pred_region
      _
    $region9: #{tpu_custom_call.1} parent=1 // pred_fallthru
      _
    // Predicated region
    $region10: #{tpu_custom_call.1} parent=1 // pred_check
      _
    $region11: #{tpu_custom_call.1} parent=1 // pred_check_branch
      %42 = sbr.rel (0) target = $region13
    $region12: #{tpu_custom_call.1} parent=1 // pred_region
      %s44 = ssub.s32 512, 512
      %45 = vsyncadd [#allocation6], %s44
      %s46 = sshll.u32 [#allocation5], 4
      %s47 = int_to_ptr.vmem [resolvable:$true] %s46
      %52 = dma.hbm_to_vmem [thread:$0]  %s2, 512, %s47, [#allocation6], 128, 128, 8
    $region13: #{tpu_custom_call.1} parent=1 // pred_fallthru
      _
    // Predicated region
    $region14: #{tpu_custom_call.1} parent=1 // pred_check
      _
    $region15: #{tpu_custom_call.1} parent=1 // pred_check_branch
      %54 = sbr.rel (0) target = $region17
    $region16: #{tpu_custom_call.1} parent=1 // pred_region
      _
    $region17: #{tpu_custom_call.1} parent=1 // pred_fallthru
      _
    // Predicated region
    $region18: #{tpu_custom_call.1} parent=1 // pred_check
      _
    $region19: #{tpu_custom_call.1} parent=1 // pred_check_branch
      %56 = sbr.rel (0) target = $region21
    $region20: #{tpu_custom_call.1} parent=1 // pred_region
      _
    $region21: #{tpu_custom_call.1} parent=1 // pred_fallthru
      _
    // Predicated region
    $region22: #{tpu_custom_call.1} parent=1 // pred_check
      _
    $region23: #{tpu_custom_call.1} parent=1 // pred_check_branch
      %58 = sbr.rel (0) target = $region25
    $region24: #{tpu_custom_call.1} parent=1 // pred_region
      _
    $region25: #{tpu_custom_call.1} parent=1 // pred_fallthru
      _
    // Predicated region
    $region26: #{tpu_custom_call.1} parent=1 // pred_check
      _
    $region27: #{tpu_custom_call.1} parent=1 // pred_check_branch
      %60 = sbr.rel (0) target = $region29
    $region28: #{tpu_custom_call.1} parent=1 // pred_region
      %s62 = ssub.s32 512, 512
      %63 = vsyncadd [#allocation6], %s62
      %s64 = sshll.u32 [#allocation7], 4
      %s65 = int_to_ptr.vmem [resolvable:$true] %s64
      %70 = dma.hbm_to_vmem [thread:$0]  %s6, 512, %s65, [#allocation6], 128, 128, 8
    $region29: #{tpu_custom_call.1} parent=1 // pred_fallthru
      _
    // Predicated region
    $region30: #{tpu_custom_call.1} parent=1 // pred_check
      _
    $region31: #{tpu_custom_call.1} parent=1 // pred_check_branch
      %72 = sbr.rel (0) target = $region33
    $region32: #{tpu_custom_call.1} parent=1 // pred_region
      %s74 = ssub.s32 512, 512
      %75 = vsyncadd [#allocation9], %s74
      %s76 = sshll.u32 [#allocation8], 4
      %s77 = int_to_ptr.vmem [resolvable:$true] %s76
      %82 = dma.hbm_to_vmem [thread:$0]  %s7, 512, %s77, [#allocation9], 128, 128, 8
    $region33: #{tpu_custom_call.1} parent=1 // pred_fallthru
      _
    // Predicated region
    $region34: #{tpu_custom_call.1} parent=1 // pred_check
      _
    $region35: #{tpu_custom_call.1} parent=1 // pred_check_branch
      %84 = sbr.rel (0) target = $region37
    $region36: #{tpu_custom_call.1} parent=1 // pred_region
      _
    $region37: #{tpu_custom_call.1} parent=1 // pred_fallthru
      _
    // Predicated region
    $region38: #{tpu_custom_call.1} parent=1 // pred_check
      _
    $region39: #{tpu_custom_call.1} parent=1 // pred_check_branch
      %86 = sbr.rel (0) target = $region41
    $region40: #{tpu_custom_call.1} parent=1 // pred_region
      _
    $region41: #{tpu_custom_call.1} parent=1 // pred_fallthru
      _
    // Predicated region
    $region42: #{tpu_custom_call.1} parent=1 // pred_check
      _
    $region43: #{tpu_custom_call.1} parent=1 // pred_check_branch
      %88 = sbr.rel (0) target = $region45
    $region44: #{tpu_custom_call.1} parent=1 // pred_region
      _
    $region45: #{tpu_custom_call.1} parent=1 // pred_fallthru
      _
    // Predicated region
    $region46: #{tpu_custom_call.1} parent=1 // pred_check
      _
    $region47: #{tpu_custom_call.1} parent=1 // pred_check_branch
      %90 = sbr.rel (0) target = $region49
    $region48: #{tpu_custom_call.1} parent=1 // pred_region
      %s92 = ssub.s32 8192, 8192
      %93 = vsyncadd [#allocation9], %s92
      %s94 = sshll.u32 [#allocation10], 4
      %s95 = int_to_ptr.vmem [resolvable:$true] %s94
      %100 = dma.hbm_to_vmem [thread:$0]  %s11, 8192, %s95, [#allocation9], 512, 512, 32
    $region49: #{tpu_custom_call.1} parent=1 // pred_fallthru
      _
    // Predicated region
    $region50: #{tpu_custom_call.1} parent=1 // pred_check
      _
    $region51: #{tpu_custom_call.1} parent=1 // pred_check_branch
      %102 = sbr.rel (0) target = $region53
    $region52: #{tpu_custom_call.1} parent=1 // pred_region
      _
    $region53: #{tpu_custom_call.1} parent=1 // pred_fallthru
      _
    // Predicated region
    $region54: #{tpu_custom_call.1} parent=1 // pred_check
      _
    $region55: #{tpu_custom_call.1} parent=1 // pred_check_branch
      %104 = sbr.rel (0) target = $region57
    $region56: #{tpu_custom_call.1} parent=1 // pred_region
      _
    $region57: #{tpu_custom_call.1} parent=1 // pred_fallthru
      _
    // Predicated region
    $region58: #{tpu_custom_call.1} parent=1 // pred_check
      _
    $region59: #{tpu_custom_call.1} parent=1 // pred_check_branch
      %106 = sbr.rel (0) target = $region61
    $region60: #{tpu_custom_call.1} parent=1 // pred_region
      _
    $region61: #{tpu_custom_call.1} parent=1 // pred_fallthru
      _
    // Predicated region
    $region62: #{tpu_custom_call.1} parent=1 // pred_check
      _
    $region63: #{tpu_custom_call.1} parent=1 // pred_check_branch
      %108 = sbr.rel (0) target = $region65
    $region64: #{tpu_custom_call.1} parent=1 // pred_region
      %s110 = ssub.s32 512, 512
      %111 = vsyncadd [#allocation12], %s110
      %s112 = sshll.u32 [#allocation11], 4
      %s113 = int_to_ptr.vmem [resolvable:$true] %s112
      %118 = dma.hbm_to_vmem [thread:$0]  %s15, 512, %s113, [#allocation12], 128, 128, 8
    $region65: #{tpu_custom_call.1} parent=1 // pred_fallthru
      _
    // Predicated region
    $region66: #{tpu_custom_call.1} parent=1 // pred_check
      _
    $region67: #{tpu_custom_call.1} parent=1 // pred_check_branch
      %120 = sbr.rel (0) target = $region69
    $region68: #{tpu_custom_call.1} parent=1 // pred_region
      _
    $region69: #{tpu_custom_call.1} parent=1 // pred_fallthru
      _
    // Predicated region
    $region70: #{tpu_custom_call.1} parent=1 // pred_check
      _
    $region71: #{tpu_custom_call.1} parent=1 // pred_check_branch
      %122 = sbr.rel (0) target = $region73
    $region72: #{tpu_custom_call.1} parent=1 // pred_region
      %123 = dma.done [#allocation3], 256
    $region73: #{tpu_custom_call.1} parent=1 // pred_fallthru
      _
    // Predicated region
    $region74: #{tpu_custom_call.1} parent=1 // pred_check
      _
    $region75: #{tpu_custom_call.1} parent=1 // pred_check_branch
      %125 = sbr.rel (0) target = $region77
    $region76: #{tpu_custom_call.1} parent=1 // pred_region
      %126 = dma.done [#allocation6], 512
    $region77: #{tpu_custom_call.1} parent=1 // pred_fallthru
      _
    // Predicated region
    $region78: #{tpu_custom_call.1} parent=1 // pred_check
      _
    $region79: #{tpu_custom_call.1} parent=1 // pred_check_branch
      %128 = sbr.rel (0) target = $region81
    $region80: #{tpu_custom_call.1} parent=1 // pred_region
      %129 = dma.done [#allocation6], 512
    $region81: #{tpu_custom_call.1} parent=1 // pred_fallthru
      _
    // Predicated region
    $region82: #{tpu_custom_call.1} parent=1 // pred_check
      _
    $region83: #{tpu_custom_call.1} parent=1 // pred_check_branch
      %131 = sbr.rel (0) target = $region85
    $region84: #{tpu_custom_call.1} parent=1 // pred_region
      %132 = dma.done [#allocation9], 512
    $region85: #{tpu_custom_call.1} parent=1 // pred_fallthru
      _
    // Predicated region
    $region86: #{tpu_custom_call.1} parent=1 // pred_check
      _
    $region87: #{tpu_custom_call.1} parent=1 // pred_check_branch
      %134 = sbr.rel (0) target = $region89
    $region88: #{tpu_custom_call.1} parent=1 // pred_region
      %135 = dma.done [#allocation9], 8192
    $region89: #{tpu_custom_call.1} parent=1 // pred_fallthru
      _
    // Predicated region
    $region90: #{tpu_custom_call.1} parent=1 // pred_check
      _
    $region91: #{tpu_custom_call.1} parent=1 // pred_check_branch
      %137 = sbr.rel (0) target = $region93
    $region92: #{tpu_custom_call.1} parent=1 // pred_region
      %138 = dma.done [#allocation12], 512
    $region93: #{tpu_custom_call.1} parent=1 // pred_fallthru
      _
    %v139 = vld [vmem:[%s1] sm:$0xff]
    %v140 = vld [vmem:[%s1 + $0x8] sm:$0xff]
    %v141 = vld [vmem:[%s1 + $0x10] sm:$0xff]
    %v142 = vld [vmem:[%s1 + $0x18] sm:$0xff]
    %v143 = vld [vmem:[%s3] sm:$0x1]
    %v144 = vld [vmem:[%s5] sm:$0x1]
    %v145 = vld [vmem:[%s8] sm:$0x1]
    %v146 = vld [vmem:[%s12] sm:$0xf]
    %v147 = vld [vmem:[%s14] sm:$0x1]
    %v148 = vld [vmem:[%s16] sm:$0x1]
    %vm149 = vcmask 261120
    %v150 = vsel %vm149, %v139, 0.0
    %v151 = vsel %vm149, %v140, 0.0
    %v152 = vadd.f32 %v150, %v151
    %v153 = vrot.slane %v152, 4
    %v154 = vadd.f32 %v152, %v153
    %v155 = vrot.slane %v154, 2
    %v156 = vadd.f32 %v154, %v155
    %v157 = vrot.slane %v156, 1
    %v158 = vadd.f32 %v156, %v157
    %v159 = vsel %vm149, %v141, 0.0
    %v160 = vsel %vm149, %v142, 0.0
    %v161 = vadd.f32 %v159, %v160
    %v162 = vrot.slane %v161, 4
    %v163 = vadd.f32 %v161, %v162
    %v164 = vrot.slane %v163, 2
    %v165 = vadd.f32 %v163, %v164
    %v166 = vrot.slane %v165, 1
    %v167 = vadd.f32 %v165, %v166
    %v168 = vrcp.pop 16.0
    %v169 = vmul.f32 %v158, %v168
    %v170 = vmul.f32 %v167, %v168
    %v171 = vld [vmem:[#allocation5] sm:$0xff]
    %v172 = vld [vmem:[#allocation5 + $0x8] sm:$0xff]
    %v173 = vld [vmem:[#allocation5 + $0x10] sm:$0xff]
    %v174 = vld [vmem:[#allocation5 + $0x18] sm:$0xff]
    %v176 = vlaneseq
    %v177 = vshrl.u32 %v176, 7
    %v178 = vsub.s32 0, %v177
    %v179 = vrot.slane %v143, %v178
    %vm183 = vcmask 1041409
    %v184 = vsel %vm183, %v170, %v169
    %v185 = vsel %vm149, %v184, 0
    %187 = vmatprep.subr.mxu0 0.0
    %188 = vmatpush1.msra.mxu0 0.0
    %189 = vmatprep.subr.mxu0 0.0
    %190 = vmatpush1.msra.mxu0 0.0
    %191 = vmatprep.subr.mxu0 0.0
    %192 = vmatpush1.msra.mxu0 0.0
    %193 = vmatprep.subr.mxu0 0.0
    %194 = vmatpush1.msra.mxu0 0.0
    %195 = vmatprep.subr.mxu0 0.0
    %196 = vmatpush1.msra.mxu0 0.0
    %197 = vmatprep.subr.mxu0 0.0
    %198 = vmatpush1.msra.mxu0 0.0
    %199 = vmatprep.subr.mxu0 0.0
    %200 = vmatpush1.msra.mxu0 0.0
    %201 = vmatprep.subr.mxu0 0.0
    %202 = vmatpush1.msra.mxu0 0.0
    %203 = vmatprep.subr.mxu0 0.0
    %204 = vmatpush1.msra.mxu0 0.0
    %205 = vmatprep.subr.mxu0 0.0
    %206 = vmatpush1.msra.mxu0 0.0
    %207 = vmatprep.subr.mxu0 0.0
    %208 = vmatpush1.msra.mxu0 0.0
    %209 = vmatprep.subr.mxu0 0.0
    %210 = vmatpush1.msra.mxu0 0.0
    %211 = vmatprep.subr.mxu0 0.0
    %212 = vmatpush1.msra.mxu0 %v174
    %213 = vmatprep.subr.mxu0 0.0
    %214 = vmatpush1.msra.mxu0 %v173
    %215 = vmatprep.subr.mxu0 0.0
    %216 = vmatpush1.msra.mxu0 %v172
    %217 = vmatprep.subr.mxu0 0.0
    %218 = vmatpush1.msra.mxu0 %v171
    %219 = vmatprep.subr.mxu0 0.0
    %220 = vmatpush2.msra.mxu0 0.0
    %221 = vmatprep.subr.mxu0 0.0
    %222 = vmatpush2.msra.mxu0 0.0
    %223 = vmatprep.subr.mxu0 0.0
    %224 = vmatpush2.msra.mxu0 0.0
    %225 = vmatprep.subr.mxu0 0.0
    %226 = vmatpush2.msra.mxu0 0.0
    %227 = vmatprep.subr.mxu0 0.0
    %228 = vmatpush2.msra.mxu0 0.0
    %229 = vmatprep.subr.mxu0 0.0
    %230 = vmatpush2.msra.mxu0 0.0
    %231 = vmatprep.subr.mxu0 0.0
    %232 = vmatpush2.msra.mxu0 0.0
    %233 = vmatprep.subr.mxu0 0.0
    %234 = vmatpush2.msra.mxu0 0.0
    %235 = vmatprep.subr.mxu0 0.0
    %236 = vmatpush2.msra.mxu0 0.0
    %237 = vmatprep.subr.mxu0 0.0
    %238 = vmatpush2.msra.mxu0 0.0
    %239 = vmatprep.subr.mxu0 0.0
    %240 = vmatpush2.msra.mxu0 0.0
    %241 = vmatprep.subr.mxu0 0.0
    %242 = vmatpush2.msra.mxu0 0.0
    %243 = vmatprep.subr.mxu0 0.0
    %244 = vmatpush2.msra.mxu0 0.0
    %245 = vmatprep.subr.mxu0 0.0
    %246 = vmatpush2.msra.mxu0 0.0
    %247 = vmatprep.subr.mxu0 0.0
    %248 = vmatpush2.msra.mxu0 0.0
    %249 = vmatprep.subr.mxu0 0.0
    %250 = vmatpush2.msra.mxu0 0.0
    %251 = vmatprep.mubr.f32.mxu0 0.0
    %252 = vmatmul.mubr.f32.gmra.mxu0 %v185
    %v253 = vpop.f32.mrf.mxu0
    %v254 = vadd.f32 %v179, %v253
    %v255 = vpop.f32.mrf.mxu0
    %256 = vdwg.mxu0
    %v257 = vtanh.pop %v254
    loop: start=0, step=1, limit=8
    $region94: #{tpu_custom_call.1} parent=1 // loop_pre_header
      _
    $region95: #{tpu_custom_call.1} parent=1 // loop_header
      %s259 = sphi 0, %s263
      %p260 = scmp.ge.s32.totalorder %s259, 8
      %v264 = vphi %v257, %v1500
      %v265 = vphi %v257, %v1498
    $region96: #{tpu_custom_call.1} parent=1 // loop_header_branch
      %262 = sbr.rel (%p260) target = $region100
    $region97: #{tpu_custom_call.1} parent=1 // loop_body
      %s266 = smul.u32 %s259, 2
      %s267 = scalar_lea.vmem [#allocation2], %s266
      %v268 = vld [vmem:[%s267] sm:$0x3]
      %v269 = vld [vmem:[%s4] sm:$0xff]
      %v270 = vld [vmem:[%s4 + $0x8] sm:$0xff]
      %v271 = vld [vmem:[%s4 + $0x10] sm:$0xff]
      %v272 = vld [vmem:[%s4 + $0x18] sm:$0xff]
      %v273 = vld [vmem:[%s4 + $0x20] sm:$0xff]
      %v274 = vld [vmem:[%s4 + $0x28] sm:$0xff]
      %v275 = vld [vmem:[%s4 + $0x30] sm:$0xff]
      %v276 = vld [vmem:[%s4 + $0x38] sm:$0xff]
      %v277 = vld [vmem:[%s4 + $0x40] sm:$0xff]
      %v278 = vld [vmem:[%s4 + $0x48] sm:$0xff]
      %v279 = vld [vmem:[%s4 + $0x50] sm:$0xff]
      %v280 = vld [vmem:[%s4 + $0x58] sm:$0xff]
      %v281 = vld [vmem:[%s4 + $0x60] sm:$0xff]
      %v282 = vld [vmem:[%s4 + $0x68] sm:$0xff]
      %v283 = vld [vmem:[%s4 + $0x70] sm:$0xff]
      %v284 = vld [vmem:[%s4 + $0x78] sm:$0xff]
      %v286 = vlaneseq
      %v287 = vshrl.u32 %v286, 7
      %v288 = vsub.s32 0, %v287
      %v289 = vrot.slane %v144, %v288
      %291 = vmatprep.subr.mxu0 0.0
      %292 = vmatpush1.msra.mxu0 %v284
      %293 = vmatprep.subr.mxu0 0.0
      %294 = vmatpush1.msra.mxu0 %v283
      %295 = vmatprep.subr.mxu0 0.0
      %296 = vmatpush1.msra.mxu0 %v282
      %297 = vmatprep.subr.mxu0 0.0
      %298 = vmatpush1.msra.mxu0 %v281
      %299 = vmatprep.subr.mxu0 0.0
      %300 = vmatpush1.msra.mxu0 %v280
      %301 = vmatprep.subr.mxu0 0.0
      %302 = vmatpush1.msra.mxu0 %v279
      %303 = vmatprep.subr.mxu0 0.0
      %304 = vmatpush1.msra.mxu0 %v278
      %305 = vmatprep.subr.mxu0 0.0
      %306 = vmatpush1.msra.mxu0 %v277
      %307 = vmatprep.subr.mxu0 0.0
      %308 = vmatpush1.msra.mxu0 %v276
      %309 = vmatprep.subr.mxu0 0.0
      %310 = vmatpush1.msra.mxu0 %v275
      %311 = vmatprep.subr.mxu0 0.0
      %312 = vmatpush1.msra.mxu0 %v274
      %313 = vmatprep.subr.mxu0 0.0
      %314 = vmatpush1.msra.mxu0 %v273
      %315 = vmatprep.subr.mxu0 0.0
      %316 = vmatpush1.msra.mxu0 %v272
      %317 = vmatprep.subr.mxu0 0.0
      %318 = vmatpush1.msra.mxu0 %v271
      %319 = vmatprep.subr.mxu0 0.0
      %320 = vmatpush1.msra.mxu0 %v270
      %321 = vmatprep.subr.mxu0 0.0
      %322 = vmatpush1.msra.mxu0 %v269
      %323 = vmatprep.subr.mxu0 0.0
      %324 = vmatpush2.msra.mxu0 0.0
      %325 = vmatprep.subr.mxu0 0.0
      %326 = vmatpush2.msra.mxu0 0.0
      %327 = vmatprep.subr.mxu0 0.0
      %328 = vmatpush2.msra.mxu0 0.0
      %329 = vmatprep.subr.mxu0 0.0
      %330 = vmatpush2.msra.mxu0 0.0
      %331 = vmatprep.subr.mxu0 0.0
      %332 = vmatpush2.msra.mxu0 0.0
      %333 = vmatprep.subr.mxu0 0.0
      %334 = vmatpush2.msra.mxu0 0.0
      %335 = vmatprep.subr.mxu0 0.0
      %336 = vmatpush2.msra.mxu0 0.0
      %337 = vmatprep.subr.mxu0 0.0
      %338 = vmatpush2.msra.mxu0 0.0
      %339 = vmatprep.subr.mxu0 0.0
      %340 = vmatpush2.msra.mxu0 0.0
      %341 = vmatprep.subr.mxu0 0.0
      %342 = vmatpush2.msra.mxu0 0.0
      %343 = vmatprep.subr.mxu0 0.0
      %344 = vmatpush2.msra.mxu0 0.0
      %345 = vmatprep.subr.mxu0 0.0
      %346 = vmatpush2.msra.mxu0 0.0
      %347 = vmatprep.subr.mxu0 0.0
      %348 = vmatpush2.msra.mxu0 0.0
      %349 = vmatprep.subr.mxu0 0.0
      %350 = vmatpush2.msra.mxu0 0.0
      %351 = vmatprep.subr.mxu0 0.0
      %352 = vmatpush2.msra.mxu0 0.0
      %353 = vmatprep.subr.mxu0 0.0
      %354 = vmatpush2.msra.mxu0 0.0
      %355 = vmatprep.mubr.f32.mxu0 0.0
      %356 = vmatmul.mubr.f32.gmra.mxu0 %v264
      %v357 = vpop.f32.mrf.mxu0
      %v358 = vadd.f32 %v289, %v357
      %v359 = vpop.f32.mrf.mxu0
      %360 = vdwg.mxu0
      %v363 = vunpack.c.l.s4 1966171168
      %v364 = vunpack.c.0.s8 %v363
      %v365 = vlaneseq
      %v366 = vshrl.u32 %v365, 7
      %v367 = vsub.s32 %v364, %v366
      %v368 = vrot.slane %v358, %v367
      %v369 = vcombine.high %v368, %v368
      %v371 = vunpack.c.l.s4 1966171168
      %v372 = vunpack.c.0.s8 %v371
      %v373 = vlaneseq
      %v374 = vshrl.u32 %v373, 7
      %v375 = vsub.s32 %v372, %v374
      %v376 = vrot.slane %v368, %v375
      %v378 = vunpack.c.l.s4 1966171168
      %v379 = vunpack.c.0.s8 %v378
      %v380 = vlaneseq
      %v381 = vshrl.u32 %v380, 7
      %v382 = vsub.s32 %v379, %v381
      %v383 = vrot.slane %v369, %v382
      %v384 = vlaneseq
      %v385 = vshrl.u32 %v384, 7
      %v386 = vsub.s32 0, %v385
      %v387 = vrot.slane %v376, %v386
      %v388 = vlaneseq
      %v389 = vshrl.u32 %v388, 7
      %v390 = vsub.s32 0, %v389
      %v391 = vrot.slane %v383, %v390
      %v394 = vmul.f32 %v387, %v139
      %v395 = vmul.f32 %v387, %v140
      %v396 = vmul.f32 %v391, %v141
      %v397 = vmul.f32 %v391, %v142
      %v398 = vsel %vm149, %v394, 0.0
      %399 = vadd.xlane.f32.xlu0 %v398
      %v400 = vpop.xlane.xlu0 %399
      %v401 = vsel %vm149, %v395, 0.0
      %402 = vadd.xlane.f32.xlu0 %v401
      %v403 = vpop.xlane.xlu0 %402
      %v404 = vsel %vm149, %v396, 0.0
      %405 = vadd.xlane.f32.xlu0 %v404
      %v406 = vpop.xlane.xlu0 %405
      %v407 = vsel %vm149, %v397, 0.0
      %408 = vadd.xlane.f32.xlu0 %v407
      %v409 = vpop.xlane.xlu0 %408
      %v414 = vlaneseq
      %v415 = vand.u32 %v414, 127
      %v416 = vlaneseq
      %v417 = vshrl.u32 %v416, 7
      %v418 = vsub.s32 %v415, %v417
      %v419 = vrot.slane %v400, %v418
      %v420 = vadd.s32 %v415, 4294967288
      %v421 = vlaneseq
      %v422 = vshrl.u32 %v421, 7
      %v423 = vsub.s32 %v420, %v422
      %v424 = vrot.slane %v403, %v423
      %vm425 = vcmask 130112
      %v426 = vsel %vm425, %v424, %v419
      %v427 = vlaneseq
      %v428 = vshrl.u32 %v427, 7
      %v429 = vsub.s32 %v415, %v428
      %v430 = vrot.slane %v406, %v429
      %v431 = vlaneseq
      %v432 = vshrl.u32 %v431, 7
      %v433 = vsub.s32 %v420, %v432
      %v434 = vrot.slane %v409, %v433
      %v435 = vsel %vm425, %v434, %v430
      %v436 = vsel %vm183, %v435, %v426
      %vm438 = vcmask 123904
      %v439 = vsel %vm438, %v436, -inf
      %440 = vmax.xlane.f32.xlu0 %v439
      %v441 = vpop.xlane.xlu0 %440
      %v443 = vlaneseq
      %v444 = vshrl.u32 %v443, 7
      %v445 = vsub.s32 0, %v444
      %v446 = vrot.slane %v441, %v445
      %v447 = vlaneseq
      %v448 = vshrl.u32 %v447, 7
      %v449 = vsub.s32 1, %v448
      %v450 = vrot.slane %v441, %v449
      %v453 = vsub.f32 %v400, %v446
      %v454 = vsub.f32 %v403, %v446
      %v455 = vsub.f32 %v406, %v450
      %v456 = vsub.f32 %v409, %v450
      %v457 = vmul.f32 %v453, 1.442695
      %v458 = vpow.pop %v457
      %v459 = vmul.f32 %v454, 1.442695
      %v460 = vpow.pop %v459
      %v461 = vmul.f32 %v455, 1.442695
      %v462 = vpow.pop %v461
      %v463 = vmul.f32 %v456, 1.442695
      %v464 = vpow.pop %v463
      %469 = vset.pattern.permute.xlu0 0
      %470 = vperm.xlu0 %469, %v458
      %v471 = vpop.permute.xlu0 %470
      %472 = vset.pattern.permute.xlu0 0
      %473 = vperm.xlu0 %472, %v460
      %v474 = vpop.permute.xlu0 %473
      %475 = vset.pattern.permute.xlu0 0
      %476 = vperm.xlu0 %475, %v462
      %v477 = vpop.permute.xlu0 %476
      %478 = vset.pattern.permute.xlu0 0
      %479 = vperm.xlu0 %478, %v464
      %v480 = vpop.permute.xlu0 %479
      %v481 = vlaneseq
      %v482 = vshrl.u32 %v481, 7
      %v483 = vsub.s32 %v415, %v482
      %v484 = vrot.slane %v471, %v483
      %v485 = vlaneseq
      %v486 = vshrl.u32 %v485, 7
      %v487 = vsub.s32 %v420, %v486
      %v488 = vrot.slane %v474, %v487
      %v489 = vsel %vm425, %v488, %v484
      %v490 = vlaneseq
      %v491 = vshrl.u32 %v490, 7
      %v492 = vsub.s32 %v415, %v491
      %v493 = vrot.slane %v477, %v492
      %v494 = vlaneseq
      %v495 = vshrl.u32 %v494, 7
      %v496 = vsub.s32 %v420, %v495
      %v497 = vrot.slane %v480, %v496
      %v498 = vsel %vm425, %v497, %v493
      %v499 = vsel %vm183, %v498, %v489
      %v501 = vsel %vm438, %v499, 0.0
      %502 = vadd.xlane.f32.xlu0 %v501
      %v503 = vpop.xlane.xlu0 %502
      %v504 = vrcp.pop %v503
      %v506 = vlaneseq
      %v507 = vshrl.u32 %v506, 7
      %v508 = vsub.s32 0, %v507
      %v509 = vrot.slane %v504, %v508
      %v510 = vlaneseq
      %v511 = vshrl.u32 %v510, 7
      %v512 = vsub.s32 1, %v511
      %v513 = vrot.slane %v504, %v512
      %v516 = vmul.f32 %v458, %v509
      %v517 = vmul.f32 %v460, %v509
      %v518 = vmul.f32 %v462, %v513
      %v519 = vmul.f32 %v464, %v513
      %521 = vset.pattern.permute.xlu0 0
      %522 = vperm.xlu0 %521, %v516
      %v523 = vpop.permute.xlu0 %522
      %526 = vset.pattern.permute.xlu0 0
      %527 = vperm.xlu0 %526, %v517
      %v528 = vpop.permute.xlu0 %527
      %531 = vset.pattern.permute.xlu0 0
      %532 = vperm.xlu0 %531, %v518
      %v533 = vpop.permute.xlu0 %532
      %536 = vset.pattern.permute.xlu0 0
      %537 = vperm.xlu0 %536, %v519
      %v538 = vpop.permute.xlu0 %537
      %v540 = vmul.f32 %v523, %v139
      %v541 = vmul.f32 %v528, %v140
      %v542 = vmul.f32 %v533, %v141
      %v543 = vmul.f32 %v538, %v142
      %v544 = vsel %vm149, %v540, 0.0
      %v545 = vsel %vm149, %v541, 0.0
      %v546 = vadd.f32 %v544, %v545
      %v547 = vrot.slane %v546, 4
      %v548 = vadd.f32 %v546, %v547
      %v549 = vrot.slane %v548, 2
      %v550 = vadd.f32 %v548, %v549
      %v551 = vrot.slane %v550, 1
      %v552 = vadd.f32 %v550, %v551
      %v553 = vsel %vm149, %v542, 0.0
      %v554 = vsel %vm149, %v543, 0.0
      %v555 = vadd.f32 %v553, %v554
      %v556 = vrot.slane %v555, 4
      %v557 = vadd.f32 %v555, %v556
      %v558 = vrot.slane %v557, 2
      %v559 = vadd.f32 %v557, %v558
      %v560 = vrot.slane %v559, 1
      %v561 = vadd.f32 %v559, %v560
      %v562 = vld [vmem:[#allocation7] sm:$0xff]
      %v563 = vld [vmem:[#allocation7 + $0x8] sm:$0xff]
      %v564 = vld [vmem:[#allocation7 + $0x10] sm:$0xff]
      %v565 = vld [vmem:[#allocation7 + $0x18] sm:$0xff]
      %v566 = vld [vmem:[#allocation8] sm:$0xff]
      %v567 = vld [vmem:[#allocation8 + $0x8] sm:$0xff]
      %v568 = vld [vmem:[#allocation8 + $0x10] sm:$0xff]
      %v569 = vld [vmem:[#allocation8 + $0x18] sm:$0xff]
      %v571 = vsel %vm149, %v268, 0
      %573 = vmatprep.subr.mxu0 0.0
      %574 = vmatpush1.msra.mxu0 0.0
      %575 = vmatprep.subr.mxu0 0.0
      %576 = vmatpush1.msra.mxu0 0.0
      %577 = vmatprep.subr.mxu0 0.0
      %578 = vmatpush1.msra.mxu0 0.0
      %579 = vmatprep.subr.mxu0 0.0
      %580 = vmatpush1.msra.mxu0 0.0
      %581 = vmatprep.subr.mxu0 0.0
      %582 = vmatpush1.msra.mxu0 0.0
      %583 = vmatprep.subr.mxu0 0.0
      %584 = vmatpush1.msra.mxu0 0.0
      %585 = vmatprep.subr.mxu0 0.0
      %586 = vmatpush1.msra.mxu0 0.0
      %587 = vmatprep.subr.mxu0 0.0
      %588 = vmatpush1.msra.mxu0 0.0
      %589 = vmatprep.subr.mxu0 0.0
      %590 = vmatpush1.msra.mxu0 0.0
      %591 = vmatprep.subr.mxu0 0.0
      %592 = vmatpush1.msra.mxu0 0.0
      %593 = vmatprep.subr.mxu0 0.0
      %594 = vmatpush1.msra.mxu0 0.0
      %595 = vmatprep.subr.mxu0 0.0
      %596 = vmatpush1.msra.mxu0 0.0
      %597 = vmatprep.subr.mxu0 0.0
      %598 = vmatpush1.msra.mxu0 %v569
      %599 = vmatprep.subr.mxu0 0.0
      %600 = vmatpush1.msra.mxu0 %v568
      %601 = vmatprep.subr.mxu0 0.0
      %602 = vmatpush1.msra.mxu0 %v567
      %603 = vmatprep.subr.mxu0 0.0
      %604 = vmatpush1.msra.mxu0 %v566
      %605 = vmatprep.subr.mxu0 0.0
      %606 = vmatpush2.msra.mxu0 0.0
      %607 = vmatprep.subr.mxu0 0.0
      %608 = vmatpush2.msra.mxu0 0.0
      %609 = vmatprep.subr.mxu0 0.0
      %610 = vmatpush2.msra.mxu0 0.0
      %611 = vmatprep.subr.mxu0 0.0
      %612 = vmatpush2.msra.mxu0 0.0
      %613 = vmatprep.subr.mxu0 0.0
      %614 = vmatpush2.msra.mxu0 0.0
      %615 = vmatprep.subr.mxu0 0.0
      %616 = vmatpush2.msra.mxu0 0.0
      %617 = vmatprep.subr.mxu0 0.0
      %618 = vmatpush2.msra.mxu0 0.0
      %619 = vmatprep.subr.mxu0 0.0
      %620 = vmatpush2.msra.mxu0 0.0
      %621 = vmatprep.subr.mxu0 0.0
      %622 = vmatpush2.msra.mxu0 0.0
      %623 = vmatprep.subr.mxu0 0.0
      %624 = vmatpush2.msra.mxu0 0.0
      %625 = vmatprep.subr.mxu0 0.0
      %626 = vmatpush2.msra.mxu0 0.0
      %627 = vmatprep.subr.mxu0 0.0
      %628 = vmatpush2.msra.mxu0 0.0
      %629 = vmatprep.subr.mxu0 0.0
      %630 = vmatpush2.msra.mxu0 0.0
      %631 = vmatprep.subr.mxu0 0.0
      %632 = vmatpush2.msra.mxu0 0.0
      %633 = vmatprep.subr.mxu0 0.0
      %634 = vmatpush2.msra.mxu0 0.0
      %635 = vmatprep.subr.mxu0 0.0
      %636 = vmatpush2.msra.mxu0 0.0
      %637 = vmatprep.mubr.f32.mxu0 0.0
      %638 = vmatmul.mubr.f32.gmra.mxu0 %v571
      %v639 = vpop.f32.mrf.mxu0
      %v640 = vadd.f32 0.0, %v639
      %v641 = vpop.f32.mrf.mxu0
      %642 = vdwg.mxu0
      %v645 = vsel %vm183, %v561, %v552
      %v646 = vsel %vm149, %v645, 0
      %648 = vmatprep.subr.mxu0 0.0
      %649 = vmatpush1.msra.mxu0 0.0
      %650 = vmatprep.subr.mxu0 0.0
      %651 = vmatpush1.msra.mxu0 0.0
      %652 = vmatprep.subr.mxu0 0.0
      %653 = vmatpush1.msra.mxu0 0.0
      %654 = vmatprep.subr.mxu0 0.0
      %655 = vmatpush1.msra.mxu0 0.0
      %656 = vmatprep.subr.mxu0 0.0
      %657 = vmatpush1.msra.mxu0 0.0
      %658 = vmatprep.subr.mxu0 0.0
      %659 = vmatpush1.msra.mxu0 0.0
      %660 = vmatprep.subr.mxu0 0.0
      %661 = vmatpush1.msra.mxu0 0.0
      %662 = vmatprep.subr.mxu0 0.0
      %663 = vmatpush1.msra.mxu0 0.0
      %664 = vmatprep.subr.mxu0 0.0
      %665 = vmatpush1.msra.mxu0 0.0
      %666 = vmatprep.subr.mxu0 0.0
      %667 = vmatpush1.msra.mxu0 0.0
      %668 = vmatprep.subr.mxu0 0.0
      %669 = vmatpush1.msra.mxu0 0.0
      %670 = vmatprep.subr.mxu0 0.0
      %671 = vmatpush1.msra.mxu0 0.0
      %672 = vmatprep.subr.mxu0 0.0
      %673 = vmatpush1.msra.mxu0 %v565
      %674 = vmatprep.subr.mxu0 0.0
      %675 = vmatpush1.msra.mxu0 %v564
      %676 = vmatprep.subr.mxu0 0.0
      %677 = vmatpush1.msra.mxu0 %v563
      %678 = vmatprep.subr.mxu0 0.0
      %679 = vmatpush1.msra.mxu0 %v562
      %680 = vmatprep.subr.mxu0 0.0
      %681 = vmatpush2.msra.mxu0 0.0
      %682 = vmatprep.subr.mxu0 0.0
      %683 = vmatpush2.msra.mxu0 0.0
      %684 = vmatprep.subr.mxu0 0.0
      %685 = vmatpush2.msra.mxu0 0.0
      %686 = vmatprep.subr.mxu0 0.0
      %687 = vmatpush2.msra.mxu0 0.0
      %688 = vmatprep.subr.mxu0 0.0
      %689 = vmatpush2.msra.mxu0 0.0
      %690 = vmatprep.subr.mxu0 0.0
      %691 = vmatpush2.msra.mxu0 0.0
      %692 = vmatprep.subr.mxu0 0.0
      %693 = vmatpush2.msra.mxu0 0.0
      %694 = vmatprep.subr.mxu0 0.0
      %695 = vmatpush2.msra.mxu0 0.0
      %696 = vmatprep.subr.mxu0 0.0
      %697 = vmatpush2.msra.mxu0 0.0
      %698 = vmatprep.subr.mxu0 0.0
      %699 = vmatpush2.msra.mxu0 0.0
      %700 = vmatprep.subr.mxu0 0.0
      %701 = vmatpush2.msra.mxu0 0.0
      %702 = vmatprep.subr.mxu0 0.0
      %703 = vmatpush2.msra.mxu0 0.0
      %704 = vmatprep.subr.mxu0 0.0
      %705 = vmatpush2.msra.mxu0 0.0
      %706 = vmatprep.subr.mxu0 0.0
      %707 = vmatpush2.msra.mxu0 0.0
      %708 = vmatprep.subr.mxu0 0.0
      %709 = vmatpush2.msra.mxu0 0.0
      %710 = vmatprep.subr.mxu0 0.0
      %711 = vmatpush2.msra.mxu0 0.0
      %712 = vmatprep.mubr.f32.mxu0 0.0
      %713 = vmatmul.mubr.f32.gmra.mxu0 %v646
      %v714 = vpop.f32.mrf.mxu0
      %v715 = vadd.f32 %v640, %v714
      %v716 = vpop.f32.mrf.mxu0
      %717 = vdwg.mxu0
      %v719 = vlaneseq
      %v720 = vshrl.u32 %v719, 7
      %v721 = vsub.s32 0, %v720
      %v722 = vrot.slane %v145, %v721
      %v724 = vadd.f32 %v715, %v722
      %v727 = vunpack.c.l.s4 1966171168
      %v728 = vunpack.c.0.s8 %v727
      %v729 = vlaneseq
      %v730 = vshrl.u32 %v729, 7
      %v731 = vsub.s32 %v728, %v730
      %v732 = vrot.slane %v724, %v731
      %v733 = vcombine.high %v732, %v732
      %v735 = vunpack.c.l.s4 1966171168
      %v736 = vunpack.c.0.s8 %v735
      %v737 = vlaneseq
      %v738 = vshrl.u32 %v737, 7
      %v739 = vsub.s32 %v736, %v738
      %v740 = vrot.slane %v732, %v739
      %v742 = vunpack.c.l.s4 1966171168
      %v743 = vunpack.c.0.s8 %v742
      %v744 = vlaneseq
      %v745 = vshrl.u32 %v744, 7
      %v746 = vsub.s32 %v743, %v745
      %v747 = vrot.slane %v733, %v746
      %v748 = vlaneseq
      %v749 = vshrl.u32 %v748, 7
      %v750 = vsub.s32 0, %v749
      %v751 = vrot.slane %v740, %v750
      %v752 = vlaneseq
      %v753 = vshrl.u32 %v752, 7
      %v754 = vsub.s32 0, %v753
      %v755 = vrot.slane %v747, %v754
      %v758 = vmul.f32 %v751, %v139
      %v759 = vmul.f32 %v751, %v140
      %v760 = vmul.f32 %v755, %v141
      %v761 = vmul.f32 %v755, %v142
      %v762 = vsel %vm149, %v758, 0.0
      %763 = vadd.xlane.f32.xlu0 %v762
      %v764 = vpop.xlane.xlu0 %763
      %v765 = vsel %vm149, %v759, 0.0
      %766 = vadd.xlane.f32.xlu0 %v765
      %v767 = vpop.xlane.xlu0 %766
      %v768 = vsel %vm149, %v760, 0.0
      %769 = vadd.xlane.f32.xlu0 %v768
      %v770 = vpop.xlane.xlu0 %769
      %v771 = vsel %vm149, %v761, 0.0
      %772 = vadd.xlane.f32.xlu0 %v771
      %v773 = vpop.xlane.xlu0 %772
      %v778 = vlaneseq
      %v779 = vshrl.u32 %v778, 7
      %v780 = vsub.s32 %v415, %v779
      %v781 = vrot.slane %v764, %v780
      %v782 = vlaneseq
      %v783 = vshrl.u32 %v782, 7
      %v784 = vsub.s32 %v420, %v783
      %v785 = vrot.slane %v767, %v784
      %v786 = vsel %vm425, %v785, %v781
      %v787 = vlaneseq
      %v788 = vshrl.u32 %v787, 7
      %v789 = vsub.s32 %v415, %v788
      %v790 = vrot.slane %v770, %v789
      %v791 = vlaneseq
      %v792 = vshrl.u32 %v791, 7
      %v793 = vsub.s32 %v420, %v792
      %v794 = vrot.slane %v773, %v793
      %v795 = vsel %vm425, %v794, %v790
      %v796 = vsel %vm183, %v795, %v786
      %v798 = vsel %vm438, %v796, -inf
      %799 = vmax.xlane.f32.xlu0 %v798
      %v800 = vpop.xlane.xlu0 %799
      %v802 = vlaneseq
      %v803 = vshrl.u32 %v802, 7
      %v804 = vsub.s32 0, %v803
      %v805 = vrot.slane %v800, %v804
      %v806 = vlaneseq
      %v807 = vshrl.u32 %v806, 7
      %v808 = vsub.s32 1, %v807
      %v809 = vrot.slane %v800, %v808
      %v812 = vsub.f32 %v764, %v805
      %v813 = vsub.f32 %v767, %v805
      %v814 = vsub.f32 %v770, %v809
      %v815 = vsub.f32 %v773, %v809
      %v816 = vmul.f32 %v812, 1.442695
      %v817 = vpow.pop %v816
      %v818 = vmul.f32 %v813, 1.442695
      %v819 = vpow.pop %v818
      %v820 = vmul.f32 %v814, 1.442695
      %v821 = vpow.pop %v820
      %v822 = vmul.f32 %v815, 1.442695
      %v823 = vpow.pop %v822
      %828 = vset.pattern.permute.xlu0 0
      %829 = vperm.xlu0 %828, %v817
      %v830 = vpop.permute.xlu0 %829
      %831 = vset.pattern.permute.xlu0 0
      %832 = vperm.xlu0 %831, %v819
      %v833 = vpop.permute.xlu0 %832
      %834 = vset.pattern.permute.xlu0 0
      %835 = vperm.xlu0 %834, %v821
      %v836 = vpop.permute.xlu0 %835
      %837 = vset.pattern.permute.xlu0 0
      %838 = vperm.xlu0 %837, %v823
      %v839 = vpop.permute.xlu0 %838
      %v840 = vlaneseq
      %v841 = vshrl.u32 %v840, 7
      %v842 = vsub.s32 %v415, %v841
      %v843 = vrot.slane %v830, %v842
      %v844 = vlaneseq
      %v845 = vshrl.u32 %v844, 7
      %v846 = vsub.s32 %v420, %v845
      %v847 = vrot.slane %v833, %v846
      %v848 = vsel %vm425, %v847, %v843
      %v849 = vlaneseq
      %v850 = vshrl.u32 %v849, 7
      %v851 = vsub.s32 %v415, %v850
      %v852 = vrot.slane %v836, %v851
      %v853 = vlaneseq
      %v854 = vshrl.u32 %v853, 7
      %v855 = vsub.s32 %v420, %v854
      %v856 = vrot.slane %v839, %v855
      %v857 = vsel %vm425, %v856, %v852
      %v858 = vsel %vm183, %v857, %v848
      %v860 = vsel %vm438, %v858, 0.0
      %861 = vadd.xlane.f32.xlu0 %v860
      %v862 = vpop.xlane.xlu0 %861
      %v863 = vrcp.pop %v862
      %v865 = vlaneseq
      %v866 = vshrl.u32 %v865, 7
      %v867 = vsub.s32 0, %v866
      %v868 = vrot.slane %v863, %v867
      %v869 = vlaneseq
      %v870 = vshrl.u32 %v869, 7
      %v871 = vsub.s32 1, %v870
      %v872 = vrot.slane %v863, %v871
      %v875 = vmul.f32 %v817, %v868
      %v876 = vmul.f32 %v819, %v868
      %v877 = vmul.f32 %v821, %v872
      %v878 = vmul.f32 %v823, %v872
      %880 = vset.pattern.permute.xlu0 0
      %881 = vperm.xlu0 %880, %v875
      %v882 = vpop.permute.xlu0 %881
      %885 = vset.pattern.permute.xlu0 0
      %886 = vperm.xlu0 %885, %v876
      %v887 = vpop.permute.xlu0 %886
      %890 = vset.pattern.permute.xlu0 0
      %891 = vperm.xlu0 %890, %v877
      %v892 = vpop.permute.xlu0 %891
      %895 = vset.pattern.permute.xlu0 0
      %896 = vperm.xlu0 %895, %v878
      %v897 = vpop.permute.xlu0 %896
      %v899 = vmul.f32 %v882, %v139
      %v900 = vmul.f32 %v887, %v140
      %v901 = vmul.f32 %v892, %v141
      %v902 = vmul.f32 %v897, %v142
      %v903 = vsel %vm149, %v899, 0.0
      %v904 = vsel %vm149, %v900, 0.0
      %v905 = vadd.f32 %v903, %v904
      %v906 = vrot.slane %v905, 4
      %v907 = vadd.f32 %v905, %v906
      %v908 = vrot.slane %v907, 2
      %v909 = vadd.f32 %v907, %v908
      %v910 = vrot.slane %v909, 1
      %v911 = vadd.f32 %v909, %v910
      %v912 = vsel %vm149, %v901, 0.0
      %v913 = vsel %vm149, %v902, 0.0
      %v914 = vadd.f32 %v912, %v913
      %v915 = vrot.slane %v914, 4
      %v916 = vadd.f32 %v914, %v915
      %v917 = vrot.slane %v916, 2
      %v918 = vadd.f32 %v916, %v917
      %v919 = vrot.slane %v918, 1
      %v920 = vadd.f32 %v918, %v919
      %v921 = vld [vmem:[%s9] sm:$0xff]
      %v922 = vld [vmem:[%s9 + $0x8] sm:$0xff]
      %v923 = vld [vmem:[%s9 + $0x10] sm:$0xff]
      %v924 = vld [vmem:[%s9 + $0x18] sm:$0xff]
      %v925 = vld [vmem:[%s9 + $0x20] sm:$0xff]
      %v926 = vld [vmem:[%s9 + $0x28] sm:$0xff]
      %v927 = vld [vmem:[%s9 + $0x30] sm:$0xff]
      %v928 = vld [vmem:[%s9 + $0x38] sm:$0xff]
      %v929 = vld [vmem:[%s9 + $0x40] sm:$0xff]
      %v930 = vld [vmem:[%s9 + $0x48] sm:$0xff]
      %v931 = vld [vmem:[%s9 + $0x50] sm:$0xff]
      %v932 = vld [vmem:[%s9 + $0x58] sm:$0xff]
      %v933 = vld [vmem:[%s9 + $0x60] sm:$0xff]
      %v934 = vld [vmem:[%s9 + $0x68] sm:$0xff]
      %v935 = vld [vmem:[%s9 + $0x70] sm:$0xff]
      %v936 = vld [vmem:[%s9 + $0x78] sm:$0xff]
      %v937 = vld [vmem:[%s10] sm:$0xff]
      %v938 = vld [vmem:[%s10 + $0x8] sm:$0xff]
      %v939 = vld [vmem:[%s10 + $0x10] sm:$0xff]
      %v940 = vld [vmem:[%s10 + $0x18] sm:$0xff]
      %v941 = vld [vmem:[%s10 + $0x20] sm:$0xff]
      %v942 = vld [vmem:[%s10 + $0x28] sm:$0xff]
      %v943 = vld [vmem:[%s10 + $0x30] sm:$0xff]
      %v944 = vld [vmem:[%s10 + $0x38] sm:$0xff]
      %v945 = vld [vmem:[%s10 + $0x40] sm:$0xff]
      %v946 = vld [vmem:[%s10 + $0x48] sm:$0xff]
      %v947 = vld [vmem:[%s10 + $0x50] sm:$0xff]
      %v948 = vld [vmem:[%s10 + $0x58] sm:$0xff]
      %v949 = vld [vmem:[%s10 + $0x60] sm:$0xff]
      %v950 = vld [vmem:[%s10 + $0x68] sm:$0xff]
      %v951 = vld [vmem:[%s10 + $0x70] sm:$0xff]
      %v952 = vld [vmem:[%s10 + $0x78] sm:$0xff]
      %953 = vmatprep.subr.mxu0 0.0
      %954 = vmatpush1.msra.mxu0 0.0
      %955 = vmatprep.subr.mxu0 0.0
      %956 = vmatpush1.msra.mxu0 0.0
      %957 = vmatprep.subr.mxu0 0.0
      %958 = vmatpush1.msra.mxu0 0.0
      %959 = vmatprep.subr.mxu0 0.0
      %960 = vmatpush1.msra.mxu0 0.0
      %961 = vmatprep.subr.mxu0 0.0
      %962 = vmatpush1.msra.mxu0 0.0
      %963 = vmatprep.subr.mxu0 0.0
      %964 = vmatpush1.msra.mxu0 0.0
      %965 = vmatprep.subr.mxu0 0.0
      %966 = vmatpush1.msra.mxu0 0.0
      %967 = vmatprep.subr.mxu0 0.0
      %968 = vmatpush1.msra.mxu0 0.0
      %969 = vmatprep.subr.mxu0 0.0
      %970 = vmatpush1.msra.mxu0 0.0
      %971 = vmatprep.subr.mxu0 0.0
      %972 = vmatpush1.msra.mxu0 0.0
      %973 = vmatprep.subr.mxu0 0.0
      %974 = vmatpush1.msra.mxu0 0.0
      %975 = vmatprep.subr.mxu0 0.0
      %976 = vmatpush1.msra.mxu0 0.0
      %977 = vmatprep.subr.mxu0 %v950
      %978 = vmatpush1.msra.mxu0 %v949
      %979 = vmatprep.subr.mxu0 %v946
      %980 = vmatpush1.msra.mxu0 %v945
      %981 = vmatprep.subr.mxu0 %v942
      %982 = vmatpush1.msra.mxu0 %v941
      %983 = vmatprep.subr.mxu0 %v938
      %984 = vmatpush1.msra.mxu0 %v937
      %985 = vmatprep.subr.mxu0 0.0
      %986 = vmatpush2.msra.mxu0 0.0
      %987 = vmatprep.subr.mxu0 0.0
      %988 = vmatpush2.msra.mxu0 0.0
      %989 = vmatprep.subr.mxu0 0.0
      %990 = vmatpush2.msra.mxu0 0.0
      %991 = vmatprep.subr.mxu0 0.0
      %992 = vmatpush2.msra.mxu0 0.0
      %993 = vmatprep.subr.mxu0 0.0
      %994 = vmatpush2.msra.mxu0 0.0
      %995 = vmatprep.subr.mxu0 0.0
      %996 = vmatpush2.msra.mxu0 0.0
      %997 = vmatprep.subr.mxu0 0.0
      %998 = vmatpush2.msra.mxu0 0.0
      %999 = vmatprep.subr.mxu0 0.0
      %1000 = vmatpush2.msra.mxu0 0.0
      %1001 = vmatprep.subr.mxu0 0.0
      %1002 = vmatpush2.msra.mxu0 0.0
      %1003 = vmatprep.subr.mxu0 0.0
      %1004 = vmatpush2.msra.mxu0 0.0
      %1005 = vmatprep.subr.mxu0 0.0
      %1006 = vmatpush2.msra.mxu0 0.0
      %1007 = vmatprep.subr.mxu0 0.0
      %1008 = vmatpush2.msra.mxu0 0.0
      %1009 = vmatprep.subr.mxu0 0.0
      %1010 = vmatpush2.msra.mxu0 0.0
      %1011 = vmatprep.subr.mxu0 0.0
      %1012 = vmatpush2.msra.mxu0 0.0
      %1013 = vmatprep.subr.mxu0 0.0
      %1014 = vmatpush2.msra.mxu0 0.0
      %1015 = vmatprep.subr.mxu0 0.0
      %1016 = vmatpush2.msra.mxu0 0.0
      %1017 = vmatprep.mubr.f32.mxu0 0.0
      %1018 = vmatmul.mubr.f32.gmra.mxu0 %v571
      %v1019 = vpop.f32.mrf.mxu0
      %v1020 = vadd.f32 0.0, %v1019
      %v1021 = vpop.f32.mrf.mxu0
      %v1022 = vadd.f32 0.0, %v1021
      %1023 = vdwg.mxu0
      %1024 = vmatprep.subr.mxu0 0.0
      %1025 = vmatpush1.msra.mxu0 0.0
      %1026 = vmatprep.subr.mxu0 0.0
      %1027 = vmatpush1.msra.mxu0 0.0
      %1028 = vmatprep.subr.mxu0 0.0
      %1029 = vmatpush1.msra.mxu0 0.0
      %1030 = vmatprep.subr.mxu0 0.0
      %1031 = vmatpush1.msra.mxu0 0.0
      %1032 = vmatprep.subr.mxu0 0.0
      %1033 = vmatpush1.msra.mxu0 0.0
      %1034 = vmatprep.subr.mxu0 0.0
      %1035 = vmatpush1.msra.mxu0 0.0
      %1036 = vmatprep.subr.mxu0 0.0
      %1037 = vmatpush1.msra.mxu0 0.0
      %1038 = vmatprep.subr.mxu0 0.0
      %1039 = vmatpush1.msra.mxu0 0.0
      %1040 = vmatprep.subr.mxu0 0.0
      %1041 = vmatpush1.msra.mxu0 0.0
      %1042 = vmatprep.subr.mxu0 0.0
      %1043 = vmatpush1.msra.mxu0 0.0
      %1044 = vmatprep.subr.mxu0 0.0
      %1045 = vmatpush1.msra.mxu0 0.0
      %1046 = vmatprep.subr.mxu0 0.0
      %1047 = vmatpush1.msra.mxu0 0.0
      %1048 = vmatprep.subr.mxu0 %v952
      %1049 = vmatpush1.msra.mxu0 %v951
      %1050 = vmatprep.subr.mxu0 %v948
      %1051 = vmatpush1.msra.mxu0 %v947
      %1052 = vmatprep.subr.mxu0 %v944
      %1053 = vmatpush1.msra.mxu0 %v943
      %1054 = vmatprep.subr.mxu0 %v940
      %1055 = vmatpush1.msra.mxu0 %v939
      %1056 = vmatprep.subr.mxu0 0.0
      %1057 = vmatpush2.msra.mxu0 0.0
      %1058 = vmatprep.subr.mxu0 0.0
      %1059 = vmatpush2.msra.mxu0 0.0
      %1060 = vmatprep.subr.mxu0 0.0
      %1061 = vmatpush2.msra.mxu0 0.0
      %1062 = vmatprep.subr.mxu0 0.0
      %1063 = vmatpush2.msra.mxu0 0.0
      %1064 = vmatprep.subr.mxu0 0.0
      %1065 = vmatpush2.msra.mxu0 0.0
      %1066 = vmatprep.subr.mxu0 0.0
      %1067 = vmatpush2.msra.mxu0 0.0
      %1068 = vmatprep.subr.mxu0 0.0
      %1069 = vmatpush2.msra.mxu0 0.0
      %1070 = vmatprep.subr.mxu0 0.0
      %1071 = vmatpush2.msra.mxu0 0.0
      %1072 = vmatprep.subr.mxu0 0.0
      %1073 = vmatpush2.msra.mxu0 0.0
      %1074 = vmatprep.subr.mxu0 0.0
      %1075 = vmatpush2.msra.mxu0 0.0
      %1076 = vmatprep.subr.mxu0 0.0
      %1077 = vmatpush2.msra.mxu0 0.0
      %1078 = vmatprep.subr.mxu0 0.0
      %1079 = vmatpush2.msra.mxu0 0.0
      %1080 = vmatprep.subr.mxu0 0.0
      %1081 = vmatpush2.msra.mxu0 0.0
      %1082 = vmatprep.subr.mxu0 0.0
      %1083 = vmatpush2.msra.mxu0 0.0
      %1084 = vmatprep.subr.mxu0 0.0
      %1085 = vmatpush2.msra.mxu0 0.0
      %1086 = vmatprep.subr.mxu0 0.0
      %1087 = vmatpush2.msra.mxu0 0.0
      %1088 = vmatprep.mubr.f32.mxu0 0.0
      %1089 = vmatmul.mubr.f32.gmra.mxu0 %v571
      %v1090 = vpop.f32.mrf.mxu0
      %v1091 = vadd.f32 0.0, %v1090
      %v1092 = vpop.f32.mrf.mxu0
      %v1093 = vadd.f32 0.0, %v1092
      %1094 = vdwg.mxu0
      %v1097 = vsel %vm183, %v920, %v911
      %v1098 = vsel %vm149, %v1097, 0
      %1100 = vmatprep.subr.mxu0 0.0
      %1101 = vmatpush1.msra.mxu0 0.0
      %1102 = vmatprep.subr.mxu0 0.0
      %1103 = vmatpush1.msra.mxu0 0.0
      %1104 = vmatprep.subr.mxu0 0.0
      %1105 = vmatpush1.msra.mxu0 0.0
      %1106 = vmatprep.subr.mxu0 0.0
      %1107 = vmatpush1.msra.mxu0 0.0
      %1108 = vmatprep.subr.mxu0 0.0
      %1109 = vmatpush1.msra.mxu0 0.0
      %1110 = vmatprep.subr.mxu0 0.0
      %1111 = vmatpush1.msra.mxu0 0.0
      %1112 = vmatprep.subr.mxu0 0.0
      %1113 = vmatpush1.msra.mxu0 0.0
      %1114 = vmatprep.subr.mxu0 0.0
      %1115 = vmatpush1.msra.mxu0 0.0
      %1116 = vmatprep.subr.mxu0 0.0
      %1117 = vmatpush1.msra.mxu0 0.0
      %1118 = vmatprep.subr.mxu0 0.0
      %1119 = vmatpush1.msra.mxu0 0.0
      %1120 = vmatprep.subr.mxu0 0.0
      %1121 = vmatpush1.msra.mxu0 0.0
      %1122 = vmatprep.subr.mxu0 0.0
      %1123 = vmatpush1.msra.mxu0 0.0
      %1124 = vmatprep.subr.mxu0 %v934
      %1125 = vmatpush1.msra.mxu0 %v933
      %1126 = vmatprep.subr.mxu0 %v930
      %1127 = vmatpush1.msra.mxu0 %v929
      %1128 = vmatprep.subr.mxu0 %v926
      %1129 = vmatpush1.msra.mxu0 %v925
      %1130 = vmatprep.subr.mxu0 %v922
      %1131 = vmatpush1.msra.mxu0 %v921
      %1132 = vmatprep.subr.mxu0 0.0
      %1133 = vmatpush2.msra.mxu0 0.0
      %1134 = vmatprep.subr.mxu0 0.0
      %1135 = vmatpush2.msra.mxu0 0.0
      %1136 = vmatprep.subr.mxu0 0.0
      %1137 = vmatpush2.msra.mxu0 0.0
      %1138 = vmatprep.subr.mxu0 0.0
      %1139 = vmatpush2.msra.mxu0 0.0
      %1140 = vmatprep.subr.mxu0 0.0
      %1141 = vmatpush2.msra.mxu0 0.0
      %1142 = vmatprep.subr.mxu0 0.0
      %1143 = vmatpush2.msra.mxu0 0.0
      %1144 = vmatprep.subr.mxu0 0.0
      %1145 = vmatpush2.msra.mxu0 0.0
      %1146 = vmatprep.subr.mxu0 0.0
      %1147 = vmatpush2.msra.mxu0 0.0
      %1148 = vmatprep.subr.mxu0 0.0
      %1149 = vmatpush2.msra.mxu0 0.0
      %1150 = vmatprep.subr.mxu0 0.0
      %1151 = vmatpush2.msra.mxu0 0.0
      %1152 = vmatprep.subr.mxu0 0.0
      %1153 = vmatpush2.msra.mxu0 0.0
      %1154 = vmatprep.subr.mxu0 0.0
      %1155 = vmatpush2.msra.mxu0 0.0
      %1156 = vmatprep.subr.mxu0 0.0
      %1157 = vmatpush2.msra.mxu0 0.0
      %1158 = vmatprep.subr.mxu0 0.0
      %1159 = vmatpush2.msra.mxu0 0.0
      %1160 = vmatprep.subr.mxu0 0.0
      %1161 = vmatpush2.msra.mxu0 0.0
      %1162 = vmatprep.subr.mxu0 0.0
      %1163 = vmatpush2.msra.mxu0 0.0
      %1164 = vmatprep.mubr.f32.mxu0 0.0
      %1165 = vmatmul.mubr.f32.gmra.mxu0 %v1098
      %v1166 = vpop.f32.mrf.mxu0
      %v1167 = vadd.f32 %v1020, %v1166
      %v1168 = vpop.f32.mrf.mxu0
      %v1169 = vadd.f32 %v1022, %v1168
      %1170 = vdwg.mxu0
      %1171 = vmatprep.subr.mxu0 0.0
      %1172 = vmatpush1.msra.mxu0 0.0
      %1173 = vmatprep.subr.mxu0 0.0
      %1174 = vmatpush1.msra.mxu0 0.0
      %1175 = vmatprep.subr.mxu0 0.0
      %1176 = vmatpush1.msra.mxu0 0.0
      %1177 = vmatprep.subr.mxu0 0.0
      %1178 = vmatpush1.msra.mxu0 0.0
      %1179 = vmatprep.subr.mxu0 0.0
      %1180 = vmatpush1.msra.mxu0 0.0
      %1181 = vmatprep.subr.mxu0 0.0
      %1182 = vmatpush1.msra.mxu0 0.0
      %1183 = vmatprep.subr.mxu0 0.0
      %1184 = vmatpush1.msra.mxu0 0.0
      %1185 = vmatprep.subr.mxu0 0.0
      %1186 = vmatpush1.msra.mxu0 0.0
      %1187 = vmatprep.subr.mxu0 0.0
      %1188 = vmatpush1.msra.mxu0 0.0
      %1189 = vmatprep.subr.mxu0 0.0
      %1190 = vmatpush1.msra.mxu0 0.0
      %1191 = vmatprep.subr.mxu0 0.0
      %1192 = vmatpush1.msra.mxu0 0.0
      %1193 = vmatprep.subr.mxu0 0.0
      %1194 = vmatpush1.msra.mxu0 0.0
      %1195 = vmatprep.subr.mxu0 %v936
      %1196 = vmatpush1.msra.mxu0 %v935
      %1197 = vmatprep.subr.mxu0 %v932
      %1198 = vmatpush1.msra.mxu0 %v931
      %1199 = vmatprep.subr.mxu0 %v928
      %1200 = vmatpush1.msra.mxu0 %v927
      %1201 = vmatprep.subr.mxu0 %v924
      %1202 = vmatpush1.msra.mxu0 %v923
      %1203 = vmatprep.subr.mxu0 0.0
      %1204 = vmatpush2.msra.mxu0 0.0
      %1205 = vmatprep.subr.mxu0 0.0
      %1206 = vmatpush2.msra.mxu0 0.0
      %1207 = vmatprep.subr.mxu0 0.0
      %1208 = vmatpush2.msra.mxu0 0.0
      %1209 = vmatprep.subr.mxu0 0.0
      %1210 = vmatpush2.msra.mxu0 0.0
      %1211 = vmatprep.subr.mxu0 0.0
      %1212 = vmatpush2.msra.mxu0 0.0
      %1213 = vmatprep.subr.mxu0 0.0
      %1214 = vmatpush2.msra.mxu0 0.0
      %1215 = vmatprep.subr.mxu0 0.0
      %1216 = vmatpush2.msra.mxu0 0.0
      %1217 = vmatprep.subr.mxu0 0.0
      %1218 = vmatpush2.msra.mxu0 0.0
      %1219 = vmatprep.subr.mxu0 0.0
      %1220 = vmatpush2.msra.mxu0 0.0
      %1221 = vmatprep.subr.mxu0 0.0
      %1222 = vmatpush2.msra.mxu0 0.0
      %1223 = vmatprep.subr.mxu0 0.0
      %1224 = vmatpush2.msra.mxu0 0.0
      %1225 = vmatprep.subr.mxu0 0.0
      %1226 = vmatpush2.msra.mxu0 0.0
      %1227 = vmatprep.subr.mxu0 0.0
      %1228 = vmatpush2.msra.mxu0 0.0
      %1229 = vmatprep.subr.mxu0 0.0
      %1230 = vmatpush2.msra.mxu0 0.0
      %1231 = vmatprep.subr.mxu0 0.0
      %1232 = vmatpush2.msra.mxu0 0.0
      %1233 = vmatprep.subr.mxu0 0.0
      %1234 = vmatpush2.msra.mxu0 0.0
      %1235 = vmatprep.mubr.f32.mxu0 0.0
      %1236 = vmatmul.mubr.f32.gmra.mxu0 %v1098
      %v1237 = vpop.f32.mrf.mxu0
      %v1238 = vadd.f32 %v1091, %v1237
      %v1239 = vpop.f32.mrf.mxu0
      %v1240 = vadd.f32 %v1093, %v1239
      %1241 = vdwg.mxu0
      %v1242 = vld [vmem:[#allocation10] sm:$0xff]
      %v1243 = vld [vmem:[#allocation10 + $0x8] sm:$0xff]
      %v1244 = vld [vmem:[#allocation10 + $0x10] sm:$0xff]
      %v1245 = vld [vmem:[#allocation10 + $0x18] sm:$0xff]
      %v1246 = vld [vmem:[#allocation10 + $0x20] sm:$0xff]
      %v1247 = vld [vmem:[#allocation10 + $0x28] sm:$0xff]
      %v1248 = vld [vmem:[#allocation10 + $0x30] sm:$0xff]
      %v1249 = vld [vmem:[#allocation10 + $0x38] sm:$0xff]
      %v1250 = vld [vmem:[#allocation10 + $0x40] sm:$0xff]
      %v1251 = vld [vmem:[#allocation10 + $0x48] sm:$0xff]
      %v1252 = vld [vmem:[#allocation10 + $0x50] sm:$0xff]
      %v1253 = vld [vmem:[#allocation10 + $0x58] sm:$0xff]
      %v1254 = vld [vmem:[#allocation10 + $0x60] sm:$0xff]
      %v1255 = vld [vmem:[#allocation10 + $0x68] sm:$0xff]
      %v1256 = vld [vmem:[#allocation10 + $0x70] sm:$0xff]
      %v1257 = vld [vmem:[#allocation10 + $0x78] sm:$0xff]
      %v1258 = vld [vmem:[#allocation10 + $0x80] sm:$0xff]
      %v1259 = vld [vmem:[#allocation10 + $0x88] sm:$0xff]
      %v1260 = vld [vmem:[#allocation10 + $0x90] sm:$0xff]
      %v1261 = vld [vmem:[#allocation10 + $0x98] sm:$0xff]
      %v1262 = vld [vmem:[#allocation10 + $0xa0] sm:$0xff]
      %v1263 = vld [vmem:[#allocation10 + $0xa8] sm:$0xff]
      %v1264 = vld [vmem:[#allocation10 + $0xb0] sm:$0xff]
      %v1265 = vld [vmem:[#allocation10 + $0xb8] sm:$0xff]
      %v1266 = vld [vmem:[#allocation10 + $0xc0] sm:$0xff]
      %v1267 = vld [vmem:[#allocation10 + $0xc8] sm:$0xff]
      %v1268 = vld [vmem:[#allocation10 + $0xd0] sm:$0xff]
      %v1269 = vld [vmem:[#allocation10 + $0xd8] sm:$0xff]
      %v1270 = vld [vmem:[#allocation10 + $0xe0] sm:$0xff]
      %v1271 = vld [vmem:[#allocation10 + $0xe8] sm:$0xff]
      %v1272 = vld [vmem:[#allocation10 + $0xf0] sm:$0xff]
      %v1273 = vld [vmem:[#allocation10 + $0xf8] sm:$0xff]
      %v1274 = vld [vmem:[#allocation10 + $0x100] sm:$0xff]
      %v1275 = vld [vmem:[#allocation10 + $0x108] sm:$0xff]
      %v1276 = vld [vmem:[#allocation10 + $0x110] sm:$0xff]
      %v1277 = vld [vmem:[#allocation10 + $0x118] sm:$0xff]
      %v1278 = vld [vmem:[#allocation10 + $0x120] sm:$0xff]
      %v1279 = vld [vmem:[#allocation10 + $0x128] sm:$0xff]
      %v1280 = vld [vmem:[#allocation10 + $0x130] sm:$0xff]
      %v1281 = vld [vmem:[#allocation10 + $0x138] sm:$0xff]
      %v1282 = vld [vmem:[#allocation10 + $0x140] sm:$0xff]
      %v1283 = vld [vmem:[#allocation10 + $0x148] sm:$0xff]
      %v1284 = vld [vmem:[#allocation10 + $0x150] sm:$0xff]
      %v1285 = vld [vmem:[#allocation10 + $0x158] sm:$0xff]
      %v1286 = vld [vmem:[#allocation10 + $0x160] sm:$0xff]
      %v1287 = vld [vmem:[#allocation10 + $0x168] sm:$0xff]
      %v1288 = vld [vmem:[#allocation10 + $0x170] sm:$0xff]
      %v1289 = vld [vmem:[#allocation10 + $0x178] sm:$0xff]
      %v1290 = vld [vmem:[#allocation10 + $0x180] sm:$0xff]
      %v1291 = vld [vmem:[#allocation10 + $0x188] sm:$0xff]
      %v1292 = vld [vmem:[#allocation10 + $0x190] sm:$0xff]
      %v1293 = vld [vmem:[#allocation10 + $0x198] sm:$0xff]
      %v1294 = vld [vmem:[#allocation10 + $0x1a0] sm:$0xff]
      %v1295 = vld [vmem:[#allocation10 + $0x1a8] sm:$0xff]
      %v1296 = vld [vmem:[#allocation10 + $0x1b0] sm:$0xff]
      %v1297 = vld [vmem:[#allocation10 + $0x1b8] sm:$0xff]
      %v1298 = vld [vmem:[#allocation10 + $0x1c0] sm:$0xff]
      %v1299 = vld [vmem:[#allocation10 + $0x1c8] sm:$0xff]
      %v1300 = vld [vmem:[#allocation10 + $0x1d0] sm:$0xff]
      %v1301 = vld [vmem:[#allocation10 + $0x1d8] sm:$0xff]
      %v1302 = vld [vmem:[#allocation10 + $0x1e0] sm:$0xff]
      %v1303 = vld [vmem:[#allocation10 + $0x1e8] sm:$0xff]
      %v1304 = vld [vmem:[#allocation10 + $0x1f0] sm:$0xff]
      %v1305 = vld [vmem:[#allocation10 + $0x1f8] sm:$0xff]
      %1306 = vmatprep.subr.mxu0 %v1303
      %1307 = vmatpush1.msra.mxu0 %v1302
      %1308 = vmatprep.subr.mxu0 %v1299
      %1309 = vmatpush1.msra.mxu0 %v1298
      %1310 = vmatprep.subr.mxu0 %v1295
      %1311 = vmatpush1.msra.mxu0 %v1294
      %1312 = vmatprep.subr.mxu0 %v1291
      %1313 = vmatpush1.msra.mxu0 %v1290
      %1314 = vmatprep.subr.mxu0 %v1287
      %1315 = vmatpush1.msra.mxu0 %v1286
      %1316 = vmatprep.subr.mxu0 %v1283
      %1317 = vmatpush1.msra.mxu0 %v1282
      %1318 = vmatprep.subr.mxu0 %v1279
      %1319 = vmatpush1.msra.mxu0 %v1278
      %1320 = vmatprep.subr.mxu0 %v1275
      %1321 = vmatpush1.msra.mxu0 %v1274
      %1322 = vmatprep.subr.mxu0 %v1271
      %1323 = vmatpush1.msra.mxu0 %v1270
      %1324 = vmatprep.subr.mxu0 %v1267
      %1325 = vmatpush1.msra.mxu0 %v1266
      %1326 = vmatprep.subr.mxu0 %v1263
      %1327 = vmatpush1.msra.mxu0 %v1262
      %1328 = vmatprep.subr.mxu0 %v1259
      %1329 = vmatpush1.msra.mxu0 %v1258
      %1330 = vmatprep.subr.mxu0 %v1255
      %1331 = vmatpush1.msra.mxu0 %v1254
      %1332 = vmatprep.subr.mxu0 %v1251
      %1333 = vmatpush1.msra.mxu0 %v1250
      %1334 = vmatprep.subr.mxu0 %v1247
      %1335 = vmatpush1.msra.mxu0 %v1246
      %1336 = vmatprep.subr.mxu0 %v1243
      %1337 = vmatpush1.msra.mxu0 %v1242
      %1338 = vmatprep.subr.mxu0 0.0
      %1339 = vmatpush2.msra.mxu0 0.0
      %1340 = vmatprep.subr.mxu0 0.0
      %1341 = vmatpush2.msra.mxu0 0.0
      %1342 = vmatprep.subr.mxu0 0.0
      %1343 = vmatpush2.msra.mxu0 0.0
      %1344 = vmatprep.subr.mxu0 0.0
      %1345 = vmatpush2.msra.mxu0 0.0
      %1346 = vmatprep.subr.mxu0 0.0
      %1347 = vmatpush2.msra.mxu0 0.0
      %1348 = vmatprep.subr.mxu0 0.0
      %1349 = vmatpush2.msra.mxu0 0.0
      %1350 = vmatprep.subr.mxu0 0.0
      %1351 = vmatpush2.msra.mxu0 0.0
      %1352 = vmatprep.subr.mxu0 0.0
      %1353 = vmatpush2.msra.mxu0 0.0
      %1354 = vmatprep.subr.mxu0 0.0
      %1355 = vmatpush2.msra.mxu0 0.0
      %1356 = vmatprep.subr.mxu0 0.0
      %1357 = vmatpush2.msra.mxu0 0.0
      %1358 = vmatprep.subr.mxu0 0.0
      %1359 = vmatpush2.msra.mxu0 0.0
      %1360 = vmatprep.subr.mxu0 0.0
      %1361 = vmatpush2.msra.mxu0 0.0
      %1362 = vmatprep.subr.mxu0 0.0
      %1363 = vmatpush2.msra.mxu0 0.0
      %1364 = vmatprep.subr.mxu0 0.0
      %1365 = vmatpush2.msra.mxu0 0.0
      %1366 = vmatprep.subr.mxu0 0.0
      %1367 = vmatpush2.msra.mxu0 0.0
      %1368 = vmatprep.subr.mxu0 0.0
      %1369 = vmatpush2.msra.mxu0 0.0
      %1370 = vmatprep.mubr.f32.mxu0 0.0
      %1371 = vmatmul.mubr.f32.gmra.mxu0 %v264
      %v1372 = vpop.f32.mrf.mxu0
      %v1373 = vadd.f32 0.0, %v1372
      %v1374 = vpop.f32.mrf.mxu0
      %v1375 = vadd.f32 0.0, %v1374
      %1376 = vdwg.mxu0
      %1377 = vmatprep.subr.mxu0 %v1305
      %1378 = vmatpush1.msra.mxu0 %v1304
      %1379 = vmatprep.subr.mxu0 %v1301
      %1380 = vmatpush1.msra.mxu0 %v1300
      %1381 = vmatprep.subr.mxu0 %v1297
      %1382 = vmatpush1.msra.mxu0 %v1296
      %1383 = vmatprep.subr.mxu0 %v1293
      %1384 = vmatpush1.msra.mxu0 %v1292
      %1385 = vmatprep.subr.mxu0 %v1289
      %1386 = vmatpush1.msra.mxu0 %v1288
      %1387 = vmatprep.subr.mxu0 %v1285
      %1388 = vmatpush1.msra.mxu0 %v1284
      %1389 = vmatprep.subr.mxu0 %v1281
      %1390 = vmatpush1.msra.mxu0 %v1280
      %1391 = vmatprep.subr.mxu0 %v1277
      %1392 = vmatpush1.msra.mxu0 %v1276
      %1393 = vmatprep.subr.mxu0 %v1273
      %1394 = vmatpush1.msra.mxu0 %v1272
      %1395 = vmatprep.subr.mxu0 %v1269
      %1396 = vmatpush1.msra.mxu0 %v1268
      %1397 = vmatprep.subr.mxu0 %v1265
      %1398 = vmatpush1.msra.mxu0 %v1264
      %1399 = vmatprep.subr.mxu0 %v1261
      %1400 = vmatpush1.msra.mxu0 %v1260
      %1401 = vmatprep.subr.mxu0 %v1257
      %1402 = vmatpush1.msra.mxu0 %v1256
      %1403 = vmatprep.subr.mxu0 %v1253
      %1404 = vmatpush1.msra.mxu0 %v1252
      %1405 = vmatprep.subr.mxu0 %v1249
      %1406 = vmatpush1.msra.mxu0 %v1248
      %1407 = vmatprep.subr.mxu0 %v1245
      %1408 = vmatpush1.msra.mxu0 %v1244
      %1409 = vmatprep.subr.mxu0 0.0
      %1410 = vmatpush2.msra.mxu0 0.0
      %1411 = vmatprep.subr.mxu0 0.0
      %1412 = vmatpush2.msra.mxu0 0.0
      %1413 = vmatprep.subr.mxu0 0.0
      %1414 = vmatpush2.msra.mxu0 0.0
      %1415 = vmatprep.subr.mxu0 0.0
      %1416 = vmatpush2.msra.mxu0 0.0
      %1417 = vmatprep.subr.mxu0 0.0
      %1418 = vmatpush2.msra.mxu0 0.0
      %1419 = vmatprep.subr.mxu0 0.0
      %1420 = vmatpush2.msra.mxu0 0.0
      %1421 = vmatprep.subr.mxu0 0.0
      %1422 = vmatpush2.msra.mxu0 0.0
      %1423 = vmatprep.subr.mxu0 0.0
      %1424 = vmatpush2.msra.mxu0 0.0
      %1425 = vmatprep.subr.mxu0 0.0
      %1426 = vmatpush2.msra.mxu0 0.0
      %1427 = vmatprep.subr.mxu0 0.0
      %1428 = vmatpush2.msra.mxu0 0.0
      %1429 = vmatprep.subr.mxu0 0.0
      %1430 = vmatpush2.msra.mxu0 0.0
      %1431 = vmatprep.subr.mxu0 0.0
      %1432 = vmatpush2.msra.mxu0 0.0
      %1433 = vmatprep.subr.mxu0 0.0
      %1434 = vmatpush2.msra.mxu0 0.0
      %1435 = vmatprep.subr.mxu0 0.0
      %1436 = vmatpush2.msra.mxu0 0.0
      %1437 = vmatprep.subr.mxu0 0.0
      %1438 = vmatpush2.msra.mxu0 0.0
      %1439 = vmatprep.subr.mxu0 0.0
      %1440 = vmatpush2.msra.mxu0 0.0
      %1441 = vmatprep.mubr.f32.mxu0 0.0
      %1442 = vmatmul.mubr.f32.gmra.mxu0 %v264
      %v1443 = vpop.f32.mrf.mxu0
      %v1444 = vadd.f32 0.0, %v1443
      %v1445 = vpop.f32.mrf.mxu0
      %v1446 = vadd.f32 0.0, %v1445
      %1447 = vdwg.mxu0
      %v1448 = vadd.f32 %v1167, %v1373
      %v1449 = vadd.f32 %v1169, %v1375
      %v1450 = vadd.f32 %v1238, %v1444
      %v1451 = vadd.f32 %v1240, %v1446
      %v1453 = vlaneseq
      %v1454 = vshrl.u32 %v1453, 7
      %v1455 = vsub.s32 0, %v1454
      %v1456 = vrot.slane %v146, %v1455
      %v1457 = vlaneseq
      %v1458 = vshrl.u32 %v1457, 7
      %v1459 = vsub.s32 1, %v1458
      %v1460 = vrot.slane %v146, %v1459
      %v1461 = vlaneseq
      %v1462 = vshrl.u32 %v1461, 7
      %v1463 = vsub.s32 2, %v1462
      %v1464 = vrot.slane %v146, %v1463
      %v1465 = vlaneseq
      %v1466 = vshrl.u32 %v1465, 7
      %v1467 = vsub.s32 3, %v1466
      %v1468 = vrot.slane %v146, %v1467
      %v1473 = vadd.f32 %v1448, %v1456
      %v1474 = vadd.f32 %v1449, %v1460
      %v1475 = vadd.f32 %v1450, %v1464
      %v1476 = vadd.f32 %v1451, %v1468
      %v1477 = vxor.u32 %v1473, 2147483648
      %v1478 = vmul.f32 %v1477, 1.442695
      %v1479 = vpow.pop %v1478
      %v1480 = vadd.f32 %v1479, 1.0
      %v1481 = vrcp.pop %v1480
      %v1482 = vmul.f32 1.0, %v1481
      %v1483 = vxor.u32 %v1474, 2147483648
      %v1484 = vmul.f32 %v1483, 1.442695
      %v1485 = vpow.pop %v1484
      %v1486 = vadd.f32 %v1485, 1.0
      %v1487 = vrcp.pop %v1486
      %v1488 = vmul.f32 1.0, %v1487
      %v1489 = vtanh.pop %v1475
      %v1490 = vxor.u32 %v1476, 2147483648
      %v1491 = vmul.f32 %v1490, 1.442695
      %v1492 = vpow.pop %v1491
      %v1493 = vadd.f32 %v1492, 1.0
      %v1494 = vrcp.pop %v1493
      %v1495 = vmul.f32 1.0, %v1494
      %v1496 = vmul.f32 %v1488, %v265
      %v1497 = vmul.f32 %v1482, %v1489
      %v1498 = vadd.f32 %v1496, %v1497
      %v1499 = vtanh.pop %v1498
      %v1500 = vmul.f32 %v1495, %v1499
      %v1501 = vld [vmem:[%s13] sm:$0xff]
      %v1502 = vld [vmem:[%s13 + $0x8] sm:$0xff]
      %v1503 = vld [vmem:[%s13 + $0x10] sm:$0xff]
      %v1504 = vld [vmem:[%s13 + $0x18] sm:$0xff]
      %v1505 = vld [vmem:[%s13 + $0x20] sm:$0xff]
      %v1506 = vld [vmem:[%s13 + $0x28] sm:$0xff]
      %v1507 = vld [vmem:[%s13 + $0x30] sm:$0xff]
      %v1508 = vld [vmem:[%s13 + $0x38] sm:$0xff]
      %v1509 = vld [vmem:[%s13 + $0x40] sm:$0xff]
      %v1510 = vld [vmem:[%s13 + $0x48] sm:$0xff]
      %v1511 = vld [vmem:[%s13 + $0x50] sm:$0xff]
      %v1512 = vld [vmem:[%s13 + $0x58] sm:$0xff]
      %v1513 = vld [vmem:[%s13 + $0x60] sm:$0xff]
      %v1514 = vld [vmem:[%s13 + $0x68] sm:$0xff]
      %v1515 = vld [vmem:[%s13 + $0x70] sm:$0xff]
      %v1516 = vld [vmem:[%s13 + $0x78] sm:$0xff]
      %v1518 = vlaneseq
      %v1519 = vshrl.u32 %v1518, 7
      %v1520 = vsub.s32 0, %v1519
      %v1521 = vrot.slane %v147, %v1520
      %1523 = vmatprep.subr.mxu0 0.0
      %1524 = vmatpush1.msra.mxu0 %v1516
      %1525 = vmatprep.subr.mxu0 0.0
      %1526 = vmatpush1.msra.mxu0 %v1515
      %1527 = vmatprep.subr.mxu0 0.0
      %1528 = vmatpush1.msra.mxu0 %v1514
      %1529 = vmatprep.subr.mxu0 0.0
      %1530 = vmatpush1.msra.mxu0 %v1513
      %1531 = vmatprep.subr.mxu0 0.0
      %1532 = vmatpush1.msra.mxu0 %v1512
      %1533 = vmatprep.subr.mxu0 0.0
      %1534 = vmatpush1.msra.mxu0 %v1511
      %1535 = vmatprep.subr.mxu0 0.0
      %1536 = vmatpush1.msra.mxu0 %v1510
      %1537 = vmatprep.subr.mxu0 0.0
      %1538 = vmatpush1.msra.mxu0 %v1509
      %1539 = vmatprep.subr.mxu0 0.0
      %1540 = vmatpush1.msra.mxu0 %v1508
      %1541 = vmatprep.subr.mxu0 0.0
      %1542 = vmatpush1.msra.mxu0 %v1507
      %1543 = vmatprep.subr.mxu0 0.0
      %1544 = vmatpush1.msra.mxu0 %v1506
      %1545 = vmatprep.subr.mxu0 0.0
      %1546 = vmatpush1.msra.mxu0 %v1505
      %1547 = vmatprep.subr.mxu0 0.0
      %1548 = vmatpush1.msra.mxu0 %v1504
      %1549 = vmatprep.subr.mxu0 0.0
      %1550 = vmatpush1.msra.mxu0 %v1503
      %1551 = vmatprep.subr.mxu0 0.0
      %1552 = vmatpush1.msra.mxu0 %v1502
      %1553 = vmatprep.subr.mxu0 0.0
      %1554 = vmatpush1.msra.mxu0 %v1501
      %1555 = vmatprep.subr.mxu0 0.0
      %1556 = vmatpush2.msra.mxu0 0.0
      %1557 = vmatprep.subr.mxu0 0.0
      %1558 = vmatpush2.msra.mxu0 0.0
      %1559 = vmatprep.subr.mxu0 0.0
      %1560 = vmatpush2.msra.mxu0 0.0
      %1561 = vmatprep.subr.mxu0 0.0
      %1562 = vmatpush2.msra.mxu0 0.0
      %1563 = vmatprep.subr.mxu0 0.0
      %1564 = vmatpush2.msra.mxu0 0.0
      %1565 = vmatprep.subr.mxu0 0.0
      %1566 = vmatpush2.msra.mxu0 0.0
      %1567 = vmatprep.subr.mxu0 0.0
      %1568 = vmatpush2.msra.mxu0 0.0
      %1569 = vmatprep.subr.mxu0 0.0
      %1570 = vmatpush2.msra.mxu0 0.0
      %1571 = vmatprep.subr.mxu0 0.0
      %1572 = vmatpush2.msra.mxu0 0.0
      %1573 = vmatprep.subr.mxu0 0.0
      %1574 = vmatpush2.msra.mxu0 0.0
      %1575 = vmatprep.subr.mxu0 0.0
      %1576 = vmatpush2.msra.mxu0 0.0
      %1577 = vmatprep.subr.mxu0 0.0
      %1578 = vmatpush2.msra.mxu0 0.0
      %1579 = vmatprep.subr.mxu0 0.0
      %1580 = vmatpush2.msra.mxu0 0.0
      %1581 = vmatprep.subr.mxu0 0.0
      %1582 = vmatpush2.msra.mxu0 0.0
      %1583 = vmatprep.subr.mxu0 0.0
      %1584 = vmatpush2.msra.mxu0 0.0
      %1585 = vmatprep.subr.mxu0 0.0
      %1586 = vmatpush2.msra.mxu0 0.0
      %1587 = vmatprep.mubr.f32.mxu0 0.0
      %1588 = vmatmul.mubr.f32.gmra.mxu0 %v1500
      %v1589 = vpop.f32.mrf.mxu0
      %v1590 = vadd.f32 %v1521, %v1589
      %v1591 = vpop.f32.mrf.mxu0
      %1592 = vdwg.mxu0
      %v1593 = vld [vmem:[#allocation11] sm:$0xff]
      %v1594 = vld [vmem:[#allocation11 + $0x8] sm:$0xff]
      %v1595 = vld [vmem:[#allocation11 + $0x10] sm:$0xff]
      %v1596 = vld [vmem:[#allocation11 + $0x18] sm:$0xff]
      %1597 = vmatprep.subr.mxu0 0.0
      %1598 = vmatpush1.msra.mxu0 0.0
      %1599 = vmatprep.subr.mxu0 0.0
      %1600 = vmatpush1.msra.mxu0 0.0
      %1601 = vmatprep.subr.mxu0 0.0
      %1602 = vmatpush1.msra.mxu0 0.0
      %1603 = vmatprep.subr.mxu0 0.0
      %1604 = vmatpush1.msra.mxu0 0.0
      %1605 = vmatprep.subr.mxu0 0.0
      %1606 = vmatpush1.msra.mxu0 0.0
      %1607 = vmatprep.subr.mxu0 0.0
      %1608 = vmatpush1.msra.mxu0 0.0
      %1609 = vmatprep.subr.mxu0 0.0
      %1610 = vmatpush1.msra.mxu0 0.0
      %1611 = vmatprep.subr.mxu0 0.0
      %1612 = vmatpush1.msra.mxu0 0.0
      %1613 = vmatprep.subr.mxu0 0.0
      %1614 = vmatpush1.msra.mxu0 0.0
      %1615 = vmatprep.subr.mxu0 0.0
      %1616 = vmatpush1.msra.mxu0 0.0
      %1617 = vmatprep.subr.mxu0 0.0
      %1618 = vmatpush1.msra.mxu0 0.0
      %1619 = vmatprep.subr.mxu0 0.0
      %1620 = vmatpush1.msra.mxu0 0.0
      %1621 = vmatprep.subr.mxu0 0.0
      %1622 = vmatpush1.msra.mxu0 %v1596
      %1623 = vmatprep.subr.mxu0 0.0
      %1624 = vmatpush1.msra.mxu0 %v1595
      %1625 = vmatprep.subr.mxu0 0.0
      %1626 = vmatpush1.msra.mxu0 %v1594
      %1627 = vmatprep.subr.mxu0 0.0
      %1628 = vmatpush1.msra.mxu0 %v1593
      %1629 = vmatprep.subr.mxu0 0.0
      %1630 = vmatpush2.msra.mxu0 0.0
      %1631 = vmatprep.subr.mxu0 0.0
      %1632 = vmatpush2.msra.mxu0 0.0
      %1633 = vmatprep.subr.mxu0 0.0
      %1634 = vmatpush2.msra.mxu0 0.0
      %1635 = vmatprep.subr.mxu0 0.0
      %1636 = vmatpush2.msra.mxu0 0.0
      %1637 = vmatprep.subr.mxu0 0.0
      %1638 = vmatpush2.msra.mxu0 0.0
      %1639 = vmatprep.subr.mxu0 0.0
      %1640 = vmatpush2.msra.mxu0 0.0
      %1641 = vmatprep.subr.mxu0 0.0
      %1642 = vmatpush2.msra.mxu0 0.0
      %1643 = vmatprep.subr.mxu0 0.0
      %1644 = vmatpush2.msra.mxu0 0.0
      %1645 = vmatprep.subr.mxu0 0.0
      %1646 = vmatpush2.msra.mxu0 0.0
      %1647 = vmatprep.subr.mxu0 0.0
      %1648 = vmatpush2.msra.mxu0 0.0
      %1649 = vmatprep.subr.mxu0 0.0
      %1650 = vmatpush2.msra.mxu0 0.0
      %1651 = vmatprep.subr.mxu0 0.0
      %1652 = vmatpush2.msra.mxu0 0.0
      %1653 = vmatprep.subr.mxu0 0.0
      %1654 = vmatpush2.msra.mxu0 0.0
      %1655 = vmatprep.subr.mxu0 0.0
      %1656 = vmatpush2.msra.mxu0 0.0
      %1657 = vmatprep.subr.mxu0 0.0
      %1658 = vmatpush2.msra.mxu0 0.0
      %1659 = vmatprep.subr.mxu0 0.0
      %1660 = vmatpush2.msra.mxu0 0.0
      %1661 = vmatprep.mubr.f32.mxu0 0.0
      %1662 = vmatmul.mubr.f32.gmra.mxu0 %v646
      %v1663 = vpop.f32.mrf.mxu0
      %v1664 = vadd.f32 0.0, %v1663
      %v1665 = vpop.f32.mrf.mxu0
      %1666 = vdwg.mxu0
      %v1667 = vadd.f32 %v1590, %v1664
      %v1669 = vlaneseq
      %v1670 = vshrl.u32 %v1669, 7
      %v1671 = vsub.s32 0, %v1670
      %v1672 = vrot.slane %v148, %v1671
      %v1674 = vadd.f32 %v1667, %v1672
      %v1675 = vadd.f32 %v1674, %v268
      %v1676 = vtanh.pop %v1675
      %s1677 = scalar_lea.vmem [#allocation13], %s266
      %vm1678 = vcmask 254976
      %1679 = vst.msk [vmem:[%s1677] sm:$0x3] %vm1678, %v1676
    $region98: #{tpu_custom_call.1} parent=1 // loop_footer
      %s263 = sadd.s32 1, %s259
    $region99: #{tpu_custom_call.1} parent=1 // loop_footer_branch
      %258 = sbr.rel target = $region95
    $region100: #{tpu_custom_call.1} parent=1 // loop_exit
      _
    // Predicated region
    $region101: #{tpu_custom_call.1} parent=1 // pred_check
      _
    $region102: #{tpu_custom_call.1} parent=1 // pred_check_branch
      %1681 = sbr.rel (0) target = $region104
    $region103: #{tpu_custom_call.1} parent=1 // pred_region
      %s1683 = ssub.s32 256, 256
      %1684 = vsyncadd [#allocation4], %s1683
      %s1685 = sshll.u32 [#allocation13], 4
      %s1686 = int_to_ptr.vmem [resolvable:$true] %s1685
      %1691 = dma.vmem_to_hbm [thread:$0]  %s1686, 256, %s17, [#allocation4], 32, 32, 2
    $region104: #{tpu_custom_call.1} parent=1 // pred_fallthru
      _
    // Predicated region
    $region105: #{tpu_custom_call.1} parent=1 // pred_check
      _
    $region106: #{tpu_custom_call.1} parent=1 // pred_check_branch
      %1693 = sbr.rel (0) target = $region108
    $region107: #{tpu_custom_call.1} parent=1 // pred_region
      %1694 = dma.done [#allocation4], 256
    $region108: #{tpu_custom_call.1} parent=1 // pred_fallthru
      _
    %1695 = vsyncpa [#allocation3], 1
    %1696 = vsyncpa [#allocation6], 1
    %1697 = vsyncpa [#allocation9], 1
    %1698 = vsyncpa [#allocation12], 1
    %1699 = vsyncpa [#allocation4], 1

</llo_original>
